<compile_context>
chip_gen: v7x
topology: tpu7x:2x2x1
jax: 0.10.0
libtpu: 0.0.40
codegen_flags: <defaults>
</compile_context>

<pallas_src>
import functools
from typing import NamedTuple

import jax
import jax.numpy as jnp
from jax.experimental import pallas as pl
from jax.experimental.pallas import tpu as pltpu

TILE_DST = 256    # default dst-node tile cap (sublane dim of adj / out)
TILE_SRC = 1024   # default src-node reduction tile cap (lane dim of adj)


# --------------------------------------------------------------------------
# Small static helpers (run in Python at prep/trace time)
# --------------------------------------------------------------------------
def _round_up(x, m):
    return ((x + m - 1) // m) * m


def _pad2d(x, rows, cols):
    r, c = x.shape
    if r == rows and c == cols:
        return x
    return jnp.pad(x, ((0, rows - r), (0, cols - c)))


def _pick_tile(n, cap, granule):
    """Largest multiple of `granule` that divides `n` and is <= cap."""
    cands = [t for t in range(granule, min(n, cap) + 1, granule) if n % t == 0]
    if not cands:
        return n
    return max(cands)


def _pick_dst_tile(n, cap, granule=16):
    """Dst tile (bf16 sublane granule 16). Prefer >= 2 tiles so the 'parallel'
    grid axis can shard across both v7x TensorCores."""
    t = _pick_tile(n, cap, granule)
    if t == n and n // 2 >= granule:
        t2 = _pick_tile(n, n // 2, granule)
        if t2 < n:
            return t2
    return t


@functools.lru_cache(maxsize=None)
def _vmem_limit_bytes():
    cap = 128 * 1024 * 1024
    try:
        info = pltpu.get_tpu_info()
        cap = int(getattr(info, "vmem_capacity_bytes", cap) or cap)
    except Exception:
        pass
    # ~75% of physical VMEM, capped at 96 MiB: 96 MiB on v5e/v6e, 48 MiB on v7x.
    return int(min(96 * 1024 * 1024, cap * 3 // 4))


class GraphMeta(NamedTuple):
    n_dst0: int
    n_src0: int
    n_dst1: int
    n_dst0_p: int
    n_src0_p: int
    n_dst1_p: int
    tile_dst0: int
    tile_src0: int
    tile_dst1: int
    tile_src1: int


# --------------------------------------------------------------------------
# Kernel: one SAGEConv layer, tiled over (dst tiles, src-reduction tiles)
# --------------------------------------------------------------------------
def _sage_kernel(adj_ref, hsrc_ref, hdst_ref, ws_ref, wn_ref, b_ref,
                 out_ref, accn_ref, accs_ref, *, apply_relu):
    k = pl.program_id(1)

    @pl.when(k == 0)
    def _init():
        accn_ref[...] = jnp.zeros_like(accn_ref)
        # Reduction-independent part hoisted off the last step.
        accs_ref[...] = (
            jnp.dot(hdst_ref[...], ws_ref[...],
                    preferred_element_type=jnp.float32)
            + b_ref[...])

    # Mean aggregation: adj rows already carry 1/deg weights (bf16 in, f32 acc).
    accn_ref[...] += jnp.dot(adj_ref[...], hsrc_ref[...],
                             preferred_element_type=jnp.float32)

    @pl.when(k == pl.num_programs(1) - 1)
    def _finalize():
        out = accs_ref[...] + jnp.dot(accn_ref[...].astype(wn_ref.dtype),
                                      wn_ref[...],
                                      preferred_element_type=jnp.float32)
        if apply_relu:
            out = jnp.maximum(out, 0.0)
        out_ref[...] = out.astype(out_ref.dtype)


def sage_conv(adj_p, hsrc_p, ws_p, wn_p, b_p, *, n_dst_p, tile_dst, tile_src,
              apply_relu, out_dtype):
    """One SAGEConv layer on pre-padded operands.

    adj_p:  (n_dst_p, n_src_p) bf16, row-normalized, zero-padded
    hsrc_p: (n_src_p, in_p)    bf16 (dst features are the leading rows)
    ws_p:   (in_p, out_p)      bf16 (self weight, transposed, padded)
    wn_p:   (in_p, out_p)      bf16 (neighbor weight)
    b_p:    (1, out_p)         f32
    """
    n_dst_pad, n_src_p = adj_p.shape
    assert n_dst_pad == n_dst_p and n_dst_p <= hsrc_p.shape[0]
    assert n_dst_p % tile_dst == 0 and n_src_p % tile_src == 0
    in_p = hsrc_p.shape[1]
    out_p = ws_p.shape[1]
    grid = (n_dst_p // tile_dst, n_src_p // tile_src)

    kernel = functools.partial(_sage_kernel, apply_relu=apply_relu)
    return pl.pallas_call(
        kernel,
        out_shape=jax.ShapeDtypeStruct((n_dst_p, out_p), out_dtype),
        grid_spec=pltpu.PrefetchScalarGridSpec(
            num_scalar_prefetch=0,
            grid=grid,
            in_specs=[
                # streamed operands (double-buffered across the grid)
                pl.BlockSpec((tile_dst, tile_src), lambda i, k: (i, k)),  # adj
                pl.BlockSpec((tile_src, in_p),     lambda i, k: (k, 0)),  # h_src
                # h_dst = prefix rows of the same h_src array (no extra copy);
                # resident across the reduction axis (constant block along k)
                pl.BlockSpec((tile_dst, in_p),     lambda i, k: (i, 0)),  # h_dst
                pl.BlockSpec((in_p, out_p),        lambda i, k: (0, 0)),  # W_self
                pl.BlockSpec((in_p, out_p),        lambda i, k: (0, 0)),  # W_neigh
                pl.BlockSpec((1, out_p),           lambda i, k: (0, 0)),  # bias
            ],
            out_specs=pl.BlockSpec((tile_dst, out_p), lambda i, k: (i, 0)),
            scratch_shapes=[pltpu.VMEM((tile_dst, in_p), jnp.float32),   # h_N acc
                            pltpu.VMEM((tile_dst, out_p), jnp.float32)], # self+bias
        ),
        compiler_params=pltpu.CompilerParams(
            dimension_semantics=("parallel", "arbitrary"),
            vmem_limit_bytes=_vmem_limit_bytes(),
        ),
    )(adj_p, hsrc_p, hsrc_p, ws_p, wn_p, b_p)


# --------------------------------------------------------------------------
# One-time prep (hoisted out of the per-forward path)
# --------------------------------------------------------------------------
def prepare_params(w1, b1, w2, b2):
    """Split the cat-linear into W_self/W_neigh, transpose, pad lanes to 128,
    cast to bf16. Done once per model."""
    in_feats = w1.shape[1] // 2
    h_feats = w1.shape[0]
    num_classes = w2.shape[0]
    in_p = _round_up(in_feats, 128)
    hid_p = _round_up(h_feats, 128)
    out_p = _round_up(num_classes, 128)

    def split_pad(w, in_f, in_pad, out_pad):
        # cat([h_dst, h_N]) @ W.T == h_dst @ W[:, :in].T + h_N @ W[:, in:].T
        ws = jnp.transpose(w[:, :in_f])
        wn = jnp.transpose(w[:, in_f:])
        ws = _pad2d(ws, in_pad, out_pad).astype(jnp.bfloat16)
        wn = _pad2d(wn, in_pad, out_pad).astype(jnp.bfloat16)
        return ws, wn

    ws1, wn1 = split_pad(w1, in_feats, in_p, hid_p)
    ws2, wn2 = split_pad(w2, h_feats, hid_p, out_p)
    b1p = _pad2d(b1.reshape(1, -1), 1, hid_p).astype(jnp.float32)
    b2p = _pad2d(b2.reshape(1, -1), 1, out_p).astype(jnp.float32)
    return {"ws1": ws1, "wn1": wn1, "b1": b1p,
            "ws2": ws2, "wn2": wn2, "b2": b2p}


def prepare_graphs(edges0, edges1, *, tile_dst_cap=TILE_DST,
                   tile_src_cap=TILE_SRC):
    """One-time MFG prep: row-normalize (mean), zero-pad to tile multiples,
    cast to bf16.  Done once per minibatch MFG so the forward path never
    touches the raw adjacency again."""
    n_dst0, n_src0 = edges0.shape
    n_dst1, n_src1 = edges1.shape
    assert n_src1 == n_dst0 and n_dst0 <= n_src0 and n_dst1 <= n_dst0

    # Layer-1 dst padding == layer-2 src padding (multiple of 128 so it works
    # both as a dst sublane dim and as a lane-aligned reduction dim).
    n_dst0_p = _round_up(n_dst0, 128)
    n_src0_p = _round_up(n_src0, 128)
    n_dst1_p = _round_up(n_dst1, 16)

    tile_src0 = _pick_tile(n_src0_p, tile_src_cap, 128)
    tile_src1 = _pick_tile(n_dst0_p, tile_src_cap, 128)
    tile_dst0 = _pick_dst_tile(n_dst0_p, tile_dst_cap)
    tile_dst1 = _pick_dst_tile(n_dst1_p, tile_dst_cap)

    def norm_pad(edges, rows, cols):
        e = edges.astype(jnp.float32)
        deg = jnp.maximum(e.sum(axis=1, keepdims=True), 1.0)
        return _pad2d(e / deg, rows, cols).astype(jnp.bfloat16)

    adj0_p = norm_pad(edges0, n_dst0_p, n_src0_p)
    adj1_p = norm_pad(edges1, n_dst1_p, n_dst0_p)
    meta = GraphMeta(n_dst0, n_src0, n_dst1, n_dst0_p, n_src0_p, n_dst1_p,
                     tile_dst0, tile_src0, tile_dst1, tile_src1)
    return adj0_p, adj1_p, meta


# --------------------------------------------------------------------------
# Model.forward(mfgs, x): two SAGEConv layers with ReLU in between
# --------------------------------------------------------------------------
@functools.partial(jax.jit, static_argnames=("meta", "num_classes"))
def model_forward(prep, adj0_p, adj1_p, x, *, meta, num_classes):
    in_p = prep["ws1"].shape[0]

    # ---- layer 1: conv1 + relu (bf16 out, rows padded == layer-2 src pad) ----
    x_p = _pad2d(x, meta.n_src0_p, in_p).astype(jnp.bfloat16)
    h1 = sage_conv(adj0_p, x_p, prep["ws1"], prep["wn1"], prep["b1"],
                   n_dst_p=meta.n_dst0_p, tile_dst=meta.tile_dst0,
                   tile_src=meta.tile_src0, apply_relu=True,
                   out_dtype=jnp.bfloat16)
    # NOTE: rows of h1 in [n_dst0, n_dst0_p) hold non-dst / bias-only values;
    # they are only ever multiplied by adj1_p's zero-padded columns or sliced
    # away below — never consumed directly.

    # ---- layer 2: conv2 (consumes h1 directly, no slice/pad/cast pass) ----
    h2 = sage_conv(adj1_p, h1, prep["ws2"], prep["wn2"], prep["b2"],
                   n_dst_p=meta.n_dst1_p, tile_dst=meta.tile_dst1,
                   tile_src=meta.tile_src1, apply_relu=False,
                   out_dtype=jnp.float32)
    return h2[:meta.n_dst1, :num_classes]


# --------------------------------------------------------------------------
# Pure-JAX references
# --------------------------------------------------------------------------
def _ref_sage(edges, h_src, h_dst, w, b, low_precision):
    deg = jnp.maximum(edges.sum(axis=1, keepdims=True), 1.0)
    adj = edges / deg
    in_f = h_src.shape[1]
    w_self = jnp.transpose(w[:, :in_f])
    w_neigh = jnp.transpose(w[:, in_f:])
    cast = (lambda a: a.astype(jnp.bfloat16)) if low_precision else (lambda a: a)
    h_n = jnp.dot(cast(adj), cast(h_src), preferred_element_type=jnp.float32)
    out = jnp.dot(cast(h_dst), cast(w_self), preferred_element_type=jnp.float32)
    out = out + jnp.dot(cast(h_n), cast(w_neigh),
                        preferred_element_type=jnp.float32)
    return out + b


def _ref_model(params, edges, x, low_precision=False):
    e0, e1 = edges
    h = _ref_sage(e0, x, x[: e0.shape[0]], params["w1"], params["b1"],
                  low_precision)
    h = jnp.maximum(h, 0.0)
    h = _ref_sage(e1, h, h[: e1.shape[0]], params["w2"], params["b2"],
                  low_precision)
    return h


if __name__ == "__main__":
    key = jax.random.PRNGKey(0)
    in_feats, h_feats, num_classes = 16, 32, 8
    # MFG0: 300 src -> 200 dst ; MFG1: 200 src -> 24 dst.
    # With the small tile caps below this exercises multi-step src reductions
    # (layer 1: 3 steps, layer 2: 2 steps) and multiple dst tiles per layer.
    n_src0, n_dst0, n_dst1 = 300, 200, 24

    k_x, k_a0, k_a1, k_w1, k_b1, k_w2, k_b2 = jax.random.split(key, 7)
    x = jax.random.normal(k_x, (n_src0, in_feats), dtype=jnp.float32)

    def make_edges(k, n_dst, n_src):
        e = (jax.random.uniform(k, (n_dst, n_src)) < 0.1).astype(jnp.float32)
        # MFG convention: dst nodes are a prefix of src nodes; self-edge so
        # every dst node has >= 1 in-neighbor (well-defined mean).
        return jnp.maximum(e, jnp.eye(n_dst, n_src, dtype=jnp.float32))

    edges0 = make_edges(k_a0, n_dst0, n_src0)
    edges1 = make_edges(k_a1, n_dst1, n_dst0)

    def linear_init(kw, kb, out_f, in_f):
        # deterministic nn.Linear-style init: U(-1/sqrt(in), 1/sqrt(in))
        bound = 1.0 / (in_f ** 0.5)
        w = jax.random.uniform(kw, (out_f, in_f), minval=-bound, maxval=bound)
        b = jax.random.uniform(kb, (out_f,), minval=-bound, maxval=bound)
        return w.astype(jnp.float32), b.astype(jnp.float32)

    w1, b1 = linear_init(k_w1, k_b1, h_feats, 2 * in_feats)
    w2, b2 = linear_init(k_w2, k_b2, num_classes, 2 * h_feats)
    params = {"w1": w1, "b1": b1, "w2": w2, "b2": b2}

    prep = prepare_params(w1, b1, w2, b2)                  # once per model
    adj0_p, adj1_p, meta = prepare_graphs(                 # once per MFG batch
        edges0, edges1, tile_dst_cap=64, tile_src_cap=128)

    out = model_forward(prep, adj0_p, adj1_p, x, meta=meta,
                        num_classes=num_classes)
    out = jax.block_until_ready(out)
    assert out.shape == (n_dst1, num_classes), out.shape
    assert bool(jnp.all(jnp.isfinite(out))), "non-finite output"

    # Tight check vs a reference applying the same bf16 input rounding
    # (kernel math matches up to f32 accumulation order).
    ref_bf16 = _ref_model(params, (edges0, edges1), x, low_precision=True)
    err_bf16 = float(jnp.max(jnp.abs(out - ref_bf16)))
    assert jnp.allclose(out, ref_bf16, atol=5e-3, rtol=5e-3), (
        "mismatch vs bf16-rounded reference, max abs err = %g" % err_bf16)

    # Looser sanity check vs full-f32 PyTorch-semantics reference
    # (bf16 MXU inputs, f32 accumulation).
    ref_f32 = _ref_model(params, (edges0, edges1), x, low_precision=False)
    err_f32 = float(jnp.max(jnp.abs(out - ref_f32)))
    assert jnp.allclose(out, ref_f32, atol=1e-1, rtol=1e-1), (
        "mismatch vs f32 reference, max abs err = %g" % err_f32)

    print("KERNEL_OK")
</pallas_src>

<mosaic_0001>
module attributes {stable_mosaic.version = 11 : i64} {
  func.func @_sage_kernel(%arg0: i32, %arg1: i32, %arg2: memref<64x128xbf16, #tpu.memory_space<vmem>>, %arg3: memref<128x128xbf16, #tpu.memory_space<vmem>>, %arg4: memref<64x128xbf16, #tpu.memory_space<vmem>>, %arg5: memref<128x128xbf16, #tpu.memory_space<vmem>>, %arg6: memref<128x128xbf16, #tpu.memory_space<vmem>>, %arg7: memref<1x128xf32, #tpu.memory_space<vmem>>, %arg8: memref<64x128xbf16, #tpu.memory_space<vmem>>, %arg9: memref<64x128xf32, #tpu.memory_space<vmem>>, %arg10: memref<64x128xf32, #tpu.memory_space<vmem>>) attributes {dimension_semantics = [#tpu.dimension_semantics<parallel>, #tpu.dimension_semantics<arbitrary>], iteration_bounds = array<i64: 4, 3>, scalar_prefetch = 0 : i64, scratch_operands = 2 : i64, tpu.core_type = #tpu.core_type<tc>, window_params = [{transform_indices = @transform_0, window_bounds = array<i64: 64, 128>}, {transform_indices = @transform_1, window_bounds = array<i64: 128, 128>}, {transform_indices = @transform_2, window_bounds = array<i64: 64, 128>}, {pipeline_mode = #tpu.pipeline_mode<synchronous>, transform_indices = @transform_3, window_bounds = array<i64: 128, 128>}, {pipeline_mode = #tpu.pipeline_mode<synchronous>, transform_indices = @transform_4, window_bounds = array<i64: 128, 128>}, {pipeline_mode = #tpu.pipeline_mode<synchronous>, transform_indices = @transform_5, window_bounds = array<i64: 1, 128>}, {transform_indices = @transform_6, window_bounds = array<i64: 64, 128>}]} {
    %c0_i32 = arith.constant 0 : i32
    %0 = arith.cmpi eq, %arg1, %c0_i32 : i32
    %1 = arith.extui %0 : i1 to i32
    %c0_i32_0 = arith.constant 0 : i32
    %2 = arith.cmpi ne, %1, %c0_i32_0 : i32
    scf.if %2 {
      %cst_9 = arith.constant 0.000000e+00 : f32
      %12 = vector.broadcast %cst_9 : f32 to vector<64x128xf32>
      %c0_10 = arith.constant 0 : index
      %c0_11 = arith.constant 0 : index
      %13 = vector.load %arg9[%c0_10, %c0_11] : memref<64x128xf32, #tpu.memory_space<vmem>>, vector<64x128xf32>
      tpu.vector_store %arg9[%c0_10, %c0_11], %12 {strides = array<i32>} : memref<64x128xf32, #tpu.memory_space<vmem>>, vector<64x128xf32>,
      %c0_12 = arith.constant 0 : index
      %c0_13 = arith.constant 0 : index
      %14 = vector.load %arg4[%c0_12, %c0_13] : memref<64x128xbf16, #tpu.memory_space<vmem>>, vector<64x128xbf16>
      %c0_14 = arith.constant 0 : index
      %c0_15 = arith.constant 0 : index
      %15 = vector.load %arg5[%c0_14, %c0_15] : memref<128x128xbf16, #tpu.memory_space<vmem>>, vector<128x128xbf16>
      %cst_16 = arith.constant dense<0.000000e+00> : vector<64x128xf32>
      %16 = tpu.matmul %14, %15, %cst_16 {dimension_numbers = #tpu.dot_dimension_numbers<[1], [0], [0], [1], [0, 0, 1, 1], [], []>} : vector<64x128xbf16>, vector<128x128xbf16>, vector<64x128xf32> -> vector<64x128xf32>
      %c0_17 = arith.constant 0 : index
      %c0_18 = arith.constant 0 : index
      %17 = vector.load %arg7[%c0_17, %c0_18] : memref<1x128xf32, #tpu.memory_space<vmem>>, vector<1x128xf32>
      %18 = vector.broadcast %17 : vector<1x128xf32> to vector<64x128xf32>
      %19 = arith.addf %16, %18 : vector<64x128xf32>
      %c0_19 = arith.constant 0 : index
      %c0_20 = arith.constant 0 : index
      %20 = vector.load %arg10[%c0_19, %c0_20] : memref<64x128xf32, #tpu.memory_space<vmem>>, vector<64x128xf32>
      tpu.vector_store %arg10[%c0_19, %c0_20], %19 {strides = array<i32>} : memref<64x128xf32, #tpu.memory_space<vmem>>, vector<64x128xf32>,
    } else {
    }
    %c0 = arith.constant 0 : index
    %c0_1 = arith.constant 0 : index
    %3 = vector.load %arg9[%c0, %c0_1] : memref<64x128xf32, #tpu.memory_space<vmem>>, vector<64x128xf32>
    %c0_2 = arith.constant 0 : index
    %c0_3 = arith.constant 0 : index
    %4 = vector.load %arg2[%c0_2, %c0_3] : memref<64x128xbf16, #tpu.memory_space<vmem>>, vector<64x128xbf16>
    %c0_4 = arith.constant 0 : index
    %c0_5 = arith.constant 0 : index
    %5 = vector.load %arg3[%c0_4, %c0_5] : memref<128x128xbf16, #tpu.memory_space<vmem>>, vector<128x128xbf16>
    %cst = arith.constant dense<0.000000e+00> : vector<64x128xf32>
    %6 = tpu.matmul %4, %5, %cst {dimension_numbers = #tpu.dot_dimension_numbers<[1], [0], [0], [1], [0, 0, 1, 1], [], []>} : vector<64x128xbf16>, vector<128x128xbf16>, vector<64x128xf32> -> vector<64x128xf32>
    %7 = arith.addf %3, %6 : vector<64x128xf32>
    %c0_6 = arith.constant 0 : index
    %c0_7 = arith.constant 0 : index
    %8 = vector.load %arg9[%c0_6, %c0_7] : memref<64x128xf32, #tpu.memory_space<vmem>>, vector<64x128xf32>
    tpu.vector_store %arg9[%c0_6, %c0_7], %7 {strides = array<i32>} : memref<64x128xf32, #tpu.memory_space<vmem>>, vector<64x128xf32>,
    %c2_i32 = arith.constant 2 : i32
    %9 = arith.cmpi eq, %arg1, %c2_i32 : i32
    %10 = arith.extui %9 : i1 to i32
    %c0_i32_8 = arith.constant 0 : i32
    %11 = arith.cmpi ne, %10, %c0_i32_8 : i32
    scf.if %11 {
      %c0_9 = arith.constant 0 : index
      %c0_10 = arith.constant 0 : index
      %12 = vector.load %arg10[%c0_9, %c0_10] : memref<64x128xf32, #tpu.memory_space<vmem>>, vector<64x128xf32>
      %c0_11 = arith.constant 0 : index
      %c0_12 = arith.constant 0 : index
      %13 = vector.load %arg9[%c0_11, %c0_12] : memref<64x128xf32, #tpu.memory_space<vmem>>, vector<64x128xf32>
      %14 = arith.truncf %13 : vector<64x128xf32> to vector<64x128xbf16>
      %c0_13 = arith.constant 0 : index
      %c0_14 = arith.constant 0 : index
      %15 = vector.load %arg6[%c0_13, %c0_14] : memref<128x128xbf16, #tpu.memory_space<vmem>>, vector<128x128xbf16>
      %cst_15 = arith.constant dense<0.000000e+00> : vector<64x128xf32>
      %16 = tpu.matmul %14, %15, %cst_15 {dimension_numbers = #tpu.dot_dimension_numbers<[1], [0], [0], [1], [0, 0, 1, 1], [], []>} : vector<64x128xbf16>, vector<128x128xbf16>, vector<64x128xf32> -> vector<64x128xf32>
      %17 = arith.addf %12, %16 : vector<64x128xf32>
      %cst_16 = arith.constant 0.000000e+00 : f32
      %18 = vector.broadcast %cst_16 : f32 to vector<64x128xf32>
      %19 = arith.maximumf %17, %18 : vector<64x128xf32>
      %20 = arith.truncf %19 : vector<64x128xf32> to vector<64x128xbf16>
      %c0_17 = arith.constant 0 : index
      %c0_18 = arith.constant 0 : index
      %21 = vector.load %arg8[%c0_17, %c0_18] : memref<64x128xbf16, #tpu.memory_space<vmem>>, vector<64x128xbf16>
      tpu.vector_store %arg8[%c0_17, %c0_18], %20 {strides = array<i32>} : memref<64x128xbf16, #tpu.memory_space<vmem>>, vector<64x128xbf16>,
    } else {
    }
    return
  }
  func.func @transform_0(%arg0: i32, %arg1: i32) -> (i32, i32) {
    %c0_i32 = arith.constant 0 : i32
    return %arg0, %arg1 : i32, i32
  }
  func.func @transform_1(%arg0: i32, %arg1: i32) -> (i32, i32) {
    %c0_i32 = arith.constant 0 : i32
    %c0_i32_0 = arith.constant 0 : i32
    return %arg1, %c0_i32 : i32, i32
  }
  func.func @transform_2(%arg0: i32, %arg1: i32) -> (i32, i32) {
    %c0_i32 = arith.constant 0 : i32
    %c0_i32_0 = arith.constant 0 : i32
    return %arg0, %c0_i32 : i32, i32
  }
  func.func @transform_3(%arg0: i32, %arg1: i32) -> (i32, i32) {
    %c0_i32 = arith.constant 0 : i32
    %c0_i32_0 = arith.constant 0 : i32
    %c0_i32_1 = arith.constant 0 : i32
    return %c0_i32, %c0_i32_0 : i32, i32
  }
  func.func @transform_4(%arg0: i32, %arg1: i32) -> (i32, i32) {
    %c0_i32 = arith.constant 0 : i32
    %c0_i32_0 = arith.constant 0 : i32
    %c0_i32_1 = arith.constant 0 : i32
    return %c0_i32, %c0_i32_0 : i32, i32
  }
  func.func @transform_5(%arg0: i32, %arg1: i32) -> (i32, i32) {
    %c0_i32 = arith.constant 0 : i32
    %c0_i32_0 = arith.constant 0 : i32
    %c0_i32_1 = arith.constant 0 : i32
    return %c0_i32, %c0_i32_0 : i32, i32
  }
  func.func @transform_6(%arg0: i32, %arg1: i32) -> (i32, i32) {
    %c0_i32 = arith.constant 0 : i32
    %c0_i32_0 = arith.constant 0 : i32
    return %arg0, %c0_i32 : i32, i32
  }
}

module attributes {stable_mosaic.version = 11 : i64} {
  func.func @_sage_kernel(%arg0: i32, %arg1: i32, %arg2: memref<16x128xbf16, #tpu.memory_space<vmem>>, %arg3: memref<128x128xbf16, #tpu.memory_space<vmem>>, %arg4: memref<16x128xbf16, #tpu.memory_space<vmem>>, %arg5: memref<128x128xbf16, #tpu.memory_space<vmem>>, %arg6: memref<128x128xbf16, #tpu.memory_space<vmem>>, %arg7: memref<1x128xf32, #tpu.memory_space<vmem>>, %arg8: memref<16x128xf32, #tpu.memory_space<vmem>>, %arg9: memref<16x128xf32, #tpu.memory_space<vmem>>, %arg10: memref<16x128xf32, #tpu.memory_space<vmem>>) attributes {dimension_semantics = [#tpu.dimension_semantics<parallel>, #tpu.dimension_semantics<arbitrary>], iteration_bounds = array<i64: 2, 2>, scalar_prefetch = 0 : i64, scratch_operands = 2 : i64, tpu.core_type = #tpu.core_type<tc>, window_params = [{transform_indices = @transform_0, window_bounds = array<i64: 16, 128>}, {transform_indices = @transform_1, window_bounds = array<i64: 128, 128>}, {transform_indices = @transform_2, window_bounds = array<i64: 16, 128>}, {pipeline_mode = #tpu.pipeline_mode<synchronous>, transform_indices = @transform_3, window_bounds = array<i64: 128, 128>}, {pipeline_mode = #tpu.pipeline_mode<synchronous>, transform_indices = @transform_4, window_bounds = array<i64: 128, 128>}, {pipeline_mode = #tpu.pipeline_mode<synchronous>, transform_indices = @transform_5, window_bounds = array<i64: 1, 128>}, {transform_indices = @transform_6, window_bounds = array<i64: 16, 128>}]} {
    %c0_i32 = arith.constant 0 : i32
    %0 = arith.cmpi eq, %arg1, %c0_i32 : i32
    %1 = arith.extui %0 : i1 to i32
    %c0_i32_0 = arith.constant 0 : i32
    %2 = arith.cmpi ne, %1, %c0_i32_0 : i32
    scf.if %2 {
      %cst_9 = arith.constant 0.000000e+00 : f32
      %12 = vector.broadcast %cst_9 : f32 to vector<16x128xf32>
      %c0_10 = arith.constant 0 : index
      %c0_11 = arith.constant 0 : index
      %13 = vector.load %arg9[%c0_10, %c0_11] : memref<16x128xf32, #tpu.memory_space<vmem>>, vector<16x128xf32>
      tpu.vector_store %arg9[%c0_10, %c0_11], %12 {strides = array<i32>} : memref<16x128xf32, #tpu.memory_space<vmem>>, vector<16x128xf32>,
      %c0_12 = arith.constant 0 : index
      %c0_13 = arith.constant 0 : index
      %14 = vector.load %arg4[%c0_12, %c0_13] : memref<16x128xbf16, #tpu.memory_space<vmem>>, vector<16x128xbf16>
      %c0_14 = arith.constant 0 : index
      %c0_15 = arith.constant 0 : index
      %15 = vector.load %arg5[%c0_14, %c0_15] : memref<128x128xbf16, #tpu.memory_space<vmem>>, vector<128x128xbf16>
      %cst_16 = arith.constant dense<0.000000e+00> : vector<16x128xf32>
      %16 = tpu.matmul %14, %15, %cst_16 {dimension_numbers = #tpu.dot_dimension_numbers<[1], [0], [0], [1], [0, 0, 1, 1], [], []>} : vector<16x128xbf16>, vector<128x128xbf16>, vector<16x128xf32> -> vector<16x128xf32>
      %c0_17 = arith.constant 0 : index
      %c0_18 = arith.constant 0 : index
      %17 = vector.load %arg7[%c0_17, %c0_18] : memref<1x128xf32, #tpu.memory_space<vmem>>, vector<1x128xf32>
      %18 = vector.broadcast %17 : vector<1x128xf32> to vector<16x128xf32>
      %19 = arith.addf %16, %18 : vector<16x128xf32>
      %c0_19 = arith.constant 0 : index
      %c0_20 = arith.constant 0 : index
      %20 = vector.load %arg10[%c0_19, %c0_20] : memref<16x128xf32, #tpu.memory_space<vmem>>, vector<16x128xf32>
      tpu.vector_store %arg10[%c0_19, %c0_20], %19 {strides = array<i32>} : memref<16x128xf32, #tpu.memory_space<vmem>>, vector<16x128xf32>,
    } else {
    }
    %c0 = arith.constant 0 : index
    %c0_1 = arith.constant 0 : index
    %3 = vector.load %arg9[%c0, %c0_1] : memref<16x128xf32, #tpu.memory_space<vmem>>, vector<16x128xf32>
    %c0_2 = arith.constant 0 : index
    %c0_3 = arith.constant 0 : index
    %4 = vector.load %arg2[%c0_2, %c0_3] : memref<16x128xbf16, #tpu.memory_space<vmem>>, vector<16x128xbf16>
    %c0_4 = arith.constant 0 : index
    %c0_5 = arith.constant 0 : index
    %5 = vector.load %arg3[%c0_4, %c0_5] : memref<128x128xbf16, #tpu.memory_space<vmem>>, vector<128x128xbf16>
    %cst = arith.constant dense<0.000000e+00> : vector<16x128xf32>
    %6 = tpu.matmul %4, %5, %cst {dimension_numbers = #tpu.dot_dimension_numbers<[1], [0], [0], [1], [0, 0, 1, 1], [], []>} : vector<16x128xbf16>, vector<128x128xbf16>, vector<16x128xf32> -> vector<16x128xf32>
    %7 = arith.addf %3, %6 : vector<16x128xf32>
    %c0_6 = arith.constant 0 : index
    %c0_7 = arith.constant 0 : index
    %8 = vector.load %arg9[%c0_6, %c0_7] : memref<16x128xf32, #tpu.memory_space<vmem>>, vector<16x128xf32>
    tpu.vector_store %arg9[%c0_6, %c0_7], %7 {strides = array<i32>} : memref<16x128xf32, #tpu.memory_space<vmem>>, vector<16x128xf32>,
    %c1_i32 = arith.constant 1 : i32
    %9 = arith.cmpi eq, %arg1, %c1_i32 : i32
    %10 = arith.extui %9 : i1 to i32
    %c0_i32_8 = arith.constant 0 : i32
    %11 = arith.cmpi ne, %10, %c0_i32_8 : i32
    scf.if %11 {
      %c0_9 = arith.constant 0 : index
      %c0_10 = arith.constant 0 : index
      %12 = vector.load %arg10[%c0_9, %c0_10] : memref<16x128xf32, #tpu.memory_space<vmem>>, vector<16x128xf32>
      %c0_11 = arith.constant 0 : index
      %c0_12 = arith.constant 0 : index
      %13 = vector.load %arg9[%c0_11, %c0_12] : memref<16x128xf32, #tpu.memory_space<vmem>>, vector<16x128xf32>
      %14 = arith.truncf %13 : vector<16x128xf32> to vector<16x128xbf16>
      %c0_13 = arith.constant 0 : index
      %c0_14 = arith.constant 0 : index
      %15 = vector.load %arg6[%c0_13, %c0_14] : memref<128x128xbf16, #tpu.memory_space<vmem>>, vector<128x128xbf16>
      %cst_15 = arith.constant dense<0.000000e+00> : vector<16x128xf32>
      %16 = tpu.matmul %14, %15, %cst_15 {dimension_numbers = #tpu.dot_dimension_numbers<[1], [0], [0], [1], [0, 0, 1, 1], [], []>} : vector<16x128xbf16>, vector<128x128xbf16>, vector<16x128xf32> -> vector<16x128xf32>
      %17 = arith.addf %12, %16 : vector<16x128xf32>
      %c0_16 = arith.constant 0 : index
      %c0_17 = arith.constant 0 : index
      %18 = vector.load %arg8[%c0_16, %c0_17] : memref<16x128xf32, #tpu.memory_space<vmem>>, vector<16x128xf32>
      tpu.vector_store %arg8[%c0_16, %c0_17], %17 {strides = array<i32>} : memref<16x128xf32, #tpu.memory_space<vmem>>, vector<16x128xf32>,
    } else {
    }
    return
  }
  func.func @transform_0(%arg0: i32, %arg1: i32) -> (i32, i32) {
    %c0_i32 = arith.constant 0 : i32
    return %arg0, %arg1 : i32, i32
  }
  func.func @transform_1(%arg0: i32, %arg1: i32) -> (i32, i32) {
    %c0_i32 = arith.constant 0 : i32
    %c0_i32_0 = arith.constant 0 : i32
    return %arg1, %c0_i32 : i32, i32
  }
  func.func @transform_2(%arg0: i32, %arg1: i32) -> (i32, i32) {
    %c0_i32 = arith.constant 0 : i32
    %c0_i32_0 = arith.constant 0 : i32
    return %arg0, %c0_i32 : i32, i32
  }
  func.func @transform_3(%arg0: i32, %arg1: i32) -> (i32, i32) {
    %c0_i32 = arith.constant 0 : i32
    %c0_i32_0 = arith.constant 0 : i32
    %c0_i32_1 = arith.constant 0 : i32
    return %c0_i32, %c0_i32_0 : i32, i32
  }
  func.func @transform_4(%arg0: i32, %arg1: i32) -> (i32, i32) {
    %c0_i32 = arith.constant 0 : i32
    %c0_i32_0 = arith.constant 0 : i32
    %c0_i32_1 = arith.constant 0 : i32
    return %c0_i32, %c0_i32_0 : i32, i32
  }
  func.func @transform_5(%arg0: i32, %arg1: i32) -> (i32, i32) {
    %c0_i32 = arith.constant 0 : i32
    %c0_i32_0 = arith.constant 0 : i32
    %c0_i32_1 = arith.constant 0 : i32
    return %c0_i32, %c0_i32_0 : i32, i32
  }
  func.func @transform_6(%arg0: i32, %arg1: i32) -> (i32, i32) {
    %c0_i32 = arith.constant 0 : i32
    %c0_i32_0 = arith.constant 0 : i32
    return %arg0, %c0_i32 : i32, i32
  }
}

</mosaic_0001>

<llo_original>
// kernel: model_forward.3
$region0: #{model_forward.3}
  #allocation0 [shape = 'u32[]', space=smem, size = 0x4, offset = 0x4, fixed_abs, tag = 'smem constant byte address 0x4 - core index']
  #allocation1 [shape = 'u32[144,128]{1,0:T(1,128)}', space=vmem, size = 0x12000, scoped, tag = 'internal scratch']
  #allocation2 [shape = 'f32[16,128]{1,0:T(8,128)}', space=vmem, size = 0x2000, scoped, tag = 'scratch operand']
  #allocation3 [shape = 'f32[16,128]{1,0:T(8,128)}', space=vmem, size = 0x2000, scoped, tag = 'scratch operand']
  %s0 = inlined_call_operand.hbm [shape: bf16[32,256], index: 0, kind: input, shape index: {}]
  %s1 = inlined_call_operand.hbm [shape: bf16[256,128], index: 1, kind: input, shape index: {}, may-alias: {1,2}]
  %s2 = inlined_call_operand.hbm [shape: bf16[256,128], index: 2, kind: input, shape index: {}, may-alias: {1,2}]
  %s3 = inlined_call_operand.hbm [shape: bf16[128,128], index: 3, kind: input, shape index: {}]
  %s4 = inlined_call_operand.hbm [shape: bf16[128,128], index: 4, kind: input, shape index: {}]
  %s5 = inlined_call_operand.hbm [shape: f32[1,128], index: 5, kind: input, shape index: {}]
  %s6 = inlined_call_operand.hbm [shape: f32[32,128], index: 6, kind: output, shape index: {}]
  %s7 = sld [smem:[#allocation0]]
  $region89: #{model_forward.3} parent=0
    _
  %s9 = ssub.s32 1, %s7
  %s10 = scalar_select 0, %s9, %s7
  $region1: #{model_forward.3} parent=0
    #allocation4 [shape = 'u8[8192]{0}', space=vmem, size = 0x2000, scoped, tag = 'input window, operand 0']
    #allocation5 [shape = 's32[2]{0}', space=sflag, size = 0x8, scoped, tag = 'scoped memory for model_forward.3']
    #allocation6 [shape = 's32[2]{0}', space=sflag, size = 0x8, scoped, tag = 'scoped memory for model_forward.3']
    #allocation7 [shape = 'u8[65536]{0}', space=vmem, size = 0x10000, scoped, tag = 'input window, operand 1']
    #allocation8 [shape = 's32[2]{0}', space=sflag, size = 0x8, scoped, tag = 'scoped memory for model_forward.3']
    #allocation9 [shape = 'u8[8192]{0}', space=vmem, size = 0x2000, scoped, tag = 'input window, operand 2']
    #allocation10 [shape = 'u8[32768]{0}', space=vmem, size = 0x8000, scoped, tag = 'input window, operand 3, single buffered']
    #allocation11 [shape = 's32[1]{0}', space=sflag, size = 0x4, scoped, tag = 'scoped memory for model_forward.3']
    #allocation12 [shape = 'u8[32768]{0}', space=vmem, size = 0x8000, scoped, tag = 'input window, operand 4, single buffered']
    #allocation13 [shape = 'u8[512]{0}', space=vmem, size = 0x400, scoped, tag = 'input window, operand 5, single buffered']
    #allocation14 [shape = 's32[1]{0}', space=sflag, size = 0x4, scoped, tag = 'scoped memory for model_forward.3']
    #allocation15 [shape = 'u8[16384]{0}', space=vmem, size = 0x4000, scoped, tag = 'output window, operand 0']
    %11 = vsyncpa [#allocation5], 0
    %s12 = scalar_lea.sflag [#allocation5], 1
    %13 = vsyncpa %s12, 0
    %14 = vsyncpa [#allocation8], 0
    %s15 = scalar_lea.sflag [#allocation8], 1
    %16 = vsyncpa %s15, 0
    %17 = vsyncpa [#allocation11], 0
    %18 = vsyncpa [#allocation14], 0
    %19 = vsyncpa [#allocation6], 0
    %s20 = scalar_lea.sflag [#allocation6], 1
    %21 = vsyncpa %s20, 0
    loop: start=0, step=1, limit=6
    $region2: #{model_forward.3} parent=1 // loop_pre_header
      _
    $region3: #{model_forward.3} parent=1 // loop_header
      %s23 = sphi 0, %s27
      %p24 = scmp.ge.s32.totalorder %s23, 6
      %s30 = sphi 0, %s42
      %s31 = sphi 0, %s38
      %s32 = sphi 0, %s30
      %s33 = sphi 0, %s31
      %s34 = sphi 0, %s32
      %s35 = sphi 0, %s33
      %s47 = sphi 0, %s49
      %s50 = sphi 0, %s47
      %s51 = sphi 0, %s50
      %s67 = sphi 0, %s51
      %s73 = sphi 0, %s75
      %s76 = sphi 0, %s73
      %s77 = sphi 0, %s76
      %s93 = sphi 0, %s77
      %s99 = sphi 0, %s101
      %s102 = sphi 0, %s99
      %s103 = sphi 0, %s102
      %s119 = sphi 0, %s103
      %s123 = sphi 0, %s123
      %s125 = sphi 0, %s123
      %s126 = sphi 0, %s125
      %s140 = sphi 0, %s126
      %s144 = sphi 0, %s144
      %s146 = sphi 0, %s144
      %s147 = sphi 0, %s146
      %s161 = sphi 0, %s147
      %s165 = sphi 0, %s165
      %s167 = sphi 0, %s165
      %s168 = sphi 0, %s167
      %s182 = sphi 0, %s168
      %s188 = sphi 0, %s190
      %s191 = sphi 0, %s188
      %s192 = sphi 0, %s191
      %s208 = sphi 0, %s192
    $region4: #{model_forward.3} parent=1 // loop_header_branch
      %26 = sbr.rel (%p24) target = $region8
    $region5: #{model_forward.3} parent=1 // loop_body
      %s28 = ssub.s32 %s23, 1
      %s29 = ssub.s32 %s23, 2
      %s36 = sadd.s32 1, %s31
      %p37 = scmp.ge.s32.totalorder %s36, 2
      %s38 = scalar_select %p37, 0, %s36
      %s39 = sadd.s32 1, %s30
      %s40 = scalar_select %p37, %s39, %s30
      %p41 = scmp.ge.s32.totalorder %s40, 2
      %s42 = scalar_select %p41, 0, %s40
      %s43 = ssub.s32 %s30, %s42
      %s44 = ssub.s32 %s31, %s38
      %s45 = sor.u32 %s43, %s44
      %p46 = scmp.eq.s32.totalorder %s45, 0
      %s48 = sadd.s32 %s47, 1
      %s49 = scalar_select %p46, %s47, %s48
      %p52 = pneg %p46
      %p53 = scmp.eq.s32.totalorder %s23, 3
      %p54 = por %p52, %p53
      %p55 = scmp.ne.s32.totalorder %s47, %s50
      %p56 = scmp.eq.s32.totalorder %s23, 0
      %p57 = por %p55, %p56
      %p58 = scmp.ne.s32.totalorder %s47, %s50
      %p59 = scmp.eq.s32.totalorder %s28, 3
      %p60 = por %p58, %p59
      %p61 = scmp.ne.s32.totalorder %s50, %s51
      %p62 = scmp.eq.s32.totalorder %s28, 0
      %p63 = por %p61, %p62
      %p64 = scmp.ne.s32.totalorder %s50, %s51
      %p65 = scmp.eq.s32.totalorder %s29, 3
      %p66 = por %p64, %p65
      %p68 = scmp.ne.s32.totalorder %s51, %s67
      %p69 = scmp.eq.s32.totalorder %s29, 0
      %p70 = por %p68, %p69
      %s71 = ssub.s32 %s31, %s38
      %p72 = scmp.eq.s32.totalorder %s71, 0
      %s74 = sadd.s32 %s73, 1
      %s75 = scalar_select %p72, %s73, %s74
      %p78 = pneg %p72
      %p79 = scmp.eq.s32.totalorder %s23, 3
      %p80 = por %p78, %p79
      %p81 = scmp.ne.s32.totalorder %s73, %s76
      %p82 = scmp.eq.s32.totalorder %s23, 0
      %p83 = por %p81, %p82
      %p84 = scmp.ne.s32.totalorder %s73, %s76
      %p85 = scmp.eq.s32.totalorder %s28, 3
      %p86 = por %p84, %p85
      %p87 = scmp.ne.s32.totalorder %s76, %s77
      %p88 = scmp.eq.s32.totalorder %s28, 0
      %p89 = por %p87, %p88
      %p90 = scmp.ne.s32.totalorder %s76, %s77
      %p91 = scmp.eq.s32.totalorder %s29, 3
      %p92 = por %p90, %p91
      %p94 = scmp.ne.s32.totalorder %s77, %s93
      %p95 = scmp.eq.s32.totalorder %s29, 0
      %p96 = por %p94, %p95
      %s97 = ssub.s32 %s30, %s42
      %p98 = scmp.eq.s32.totalorder %s97, 0
      %s100 = sadd.s32 %s99, 1
      %s101 = scalar_select %p98, %s99, %s100
      %p104 = pneg %p98
      %p105 = scmp.eq.s32.totalorder %s23, 3
      %p106 = por %p104, %p105
      %p107 = scmp.ne.s32.totalorder %s99, %s102
      %p108 = scmp.eq.s32.totalorder %s23, 0
      %p109 = por %p107, %p108
      %p110 = scmp.ne.s32.totalorder %s99, %s102
      %p111 = scmp.eq.s32.totalorder %s28, 3
      %p112 = por %p110, %p111
      %p113 = scmp.ne.s32.totalorder %s102, %s103
      %p114 = scmp.eq.s32.totalorder %s28, 0
      %p115 = por %p113, %p114
      %p116 = scmp.ne.s32.totalorder %s102, %s103
      %p117 = scmp.eq.s32.totalorder %s29, 3
      %p118 = por %p116, %p117
      %p120 = scmp.ne.s32.totalorder %s103, %s119
      %p121 = scmp.eq.s32.totalorder %s29, 0
      %p122 = por %p120, %p121
      %s124 = sadd.s32 %s123, 1
      %p127 = scmp.eq.s32.totalorder %s23, 3
      %p128 = scmp.ne.s32.totalorder %s123, %s125
      %p129 = scmp.eq.s32.totalorder %s23, 0
      %p130 = por %p128, %p129
      %p131 = scmp.ne.s32.totalorder %s123, %s125
      %p132 = scmp.eq.s32.totalorder %s28, 3
      %p133 = por %p131, %p132
      %p134 = scmp.ne.s32.totalorder %s125, %s126
      %p135 = scmp.eq.s32.totalorder %s28, 0
      %p136 = por %p134, %p135
      %p137 = scmp.ne.s32.totalorder %s125, %s126
      %p138 = scmp.eq.s32.totalorder %s29, 3
      %p139 = por %p137, %p138
      %p141 = scmp.ne.s32.totalorder %s126, %s140
      %p142 = scmp.eq.s32.totalorder %s29, 0
      %p143 = por %p141, %p142
      %s145 = sadd.s32 %s144, 1
      %p148 = scmp.eq.s32.totalorder %s23, 3
      %p149 = scmp.ne.s32.totalorder %s144, %s146
      %p150 = scmp.eq.s32.totalorder %s23, 0
      %p151 = por %p149, %p150
      %p152 = scmp.ne.s32.totalorder %s144, %s146
      %p153 = scmp.eq.s32.totalorder %s28, 3
      %p154 = por %p152, %p153
      %p155 = scmp.ne.s32.totalorder %s146, %s147
      %p156 = scmp.eq.s32.totalorder %s28, 0
      %p157 = por %p155, %p156
      %p158 = scmp.ne.s32.totalorder %s146, %s147
      %p159 = scmp.eq.s32.totalorder %s29, 3
      %p160 = por %p158, %p159
      %p162 = scmp.ne.s32.totalorder %s147, %s161
      %p163 = scmp.eq.s32.totalorder %s29, 0
      %p164 = por %p162, %p163
      %s166 = sadd.s32 %s165, 1
      %p169 = scmp.eq.s32.totalorder %s23, 3
      %p170 = scmp.ne.s32.totalorder %s165, %s167
      %p171 = scmp.eq.s32.totalorder %s23, 0
      %p172 = por %p170, %p171
      %p173 = scmp.ne.s32.totalorder %s165, %s167
      %p174 = scmp.eq.s32.totalorder %s28, 3
      %p175 = por %p173, %p174
      %p176 = scmp.ne.s32.totalorder %s167, %s168
      %p177 = scmp.eq.s32.totalorder %s28, 0
      %p178 = por %p176, %p177
      %p179 = scmp.ne.s32.totalorder %s167, %s168
      %p180 = scmp.eq.s32.totalorder %s29, 3
      %p181 = por %p179, %p180
      %p183 = scmp.ne.s32.totalorder %s168, %s182
      %p184 = scmp.eq.s32.totalorder %s29, 0
      %p185 = por %p183, %p184
      %s186 = ssub.s32 %s30, %s42
      %p187 = scmp.eq.s32.totalorder %s186, 0
      %s189 = sadd.s32 %s188, 1
      %s190 = scalar_select %p187, %s188, %s189
      %p193 = pneg %p187
      %p194 = scmp.eq.s32.totalorder %s23, 3
      %p195 = por %p193, %p194
      %p196 = scmp.ne.s32.totalorder %s188, %s191
      %p197 = scmp.eq.s32.totalorder %s23, 0
      %p198 = por %p196, %p197
      %p199 = scmp.ne.s32.totalorder %s188, %s191
      %p200 = scmp.eq.s32.totalorder %s28, 3
      %p201 = por %p199, %p200
      %p202 = scmp.ne.s32.totalorder %s191, %s192
      %p203 = scmp.eq.s32.totalorder %s28, 0
      %p204 = por %p202, %p203
      %p205 = scmp.ne.s32.totalorder %s191, %s192
      %p206 = scmp.eq.s32.totalorder %s29, 3
      %p207 = por %p205, %p206
      %p209 = scmp.ne.s32.totalorder %s192, %s208
      %p210 = scmp.eq.s32.totalorder %s29, 0
      %p211 = por %p209, %p210
      %p212 = scmp.le.s32.totalorder 1, %s23
      %p213 = scmp.lt.s32.totalorder %s23, 5
      %p214 = pnand %p212, %p213
      %p215 = pneg %p214
      // Predicated region
      $region9: #{model_forward.3} parent=5 // pred_check
        _
      $region10: #{model_forward.3} parent=5 // pred_check_branch
        %217 = sbr.rel (%p214) target = $region12
      $region11: #{model_forward.3} parent=5 // pred_region
        %s218 = ssub.s32 %s23, 1
        // Predicated region
        $region13: #{model_forward.3} parent=11 // pred_check
          %p219 = pneg %p136
        $region14: #{model_forward.3} parent=11 // pred_check_branch
          %221 = sbr.rel (%p219) target = $region16
        $region15: #{model_forward.3} parent=11 // pred_region
          %s223 = ssub.s32 1024, 1024
          %224 = vsyncadd [#allocation11], %s223
          %s225 = sshll.u32 [#allocation10], 4
          %s226 = int_to_ptr.vmem [resolvable:$true] %s225
          %231 = dma.hbm_to_vmem [thread:$0]  %s3, 1024, %s226, [#allocation11], 64, 64, 4
        $region16: #{model_forward.3} parent=11 // pred_fallthru
          _
        // Predicated region
        $region17: #{model_forward.3} parent=11 // pred_check
          %p232 = pneg %p157
        $region18: #{model_forward.3} parent=11 // pred_check_branch
          %234 = sbr.rel (%p232) target = $region20
        $region19: #{model_forward.3} parent=11 // pred_region
          %s236 = ssub.s32 1024, 1024
          %237 = vsyncadd [#allocation11], %s236
          %s238 = sshll.u32 [#allocation12], 4
          %s239 = int_to_ptr.vmem [resolvable:$true] %s238
          %244 = dma.hbm_to_vmem [thread:$0]  %s4, 1024, %s239, [#allocation11], 64, 64, 4
        $region20: #{model_forward.3} parent=11 // pred_fallthru
          _
        // Predicated region
        $region21: #{model_forward.3} parent=11 // pred_check
          %p245 = pneg %p178
        $region22: #{model_forward.3} parent=11 // pred_check_branch
          %247 = sbr.rel (%p245) target = $region24
        $region23: #{model_forward.3} parent=11 // pred_region
          %s249 = ssub.s32 16, 16
          %250 = vsyncadd [#allocation14], %s249
          %s252 = sshll.u32 [#allocation13], 4
          %s253 = int_to_ptr.vmem [resolvable:$true] %s252
          %255 = dma.hbm_to_vmem [thread:$0]  %s5, 16, %s253, [#allocation14]
        $region24: #{model_forward.3} parent=11 // pred_fallthru
          _
      $region12: #{model_forward.3} parent=5 // pred_fallthru
        _
      %p256 = scmp.lt.s32.totalorder %s23, 4
      // Predicated region
      $region25: #{model_forward.3} parent=5 // pred_check
        %p257 = pneg %p256
      $region26: #{model_forward.3} parent=5 // pred_check_branch
        %259 = sbr.rel (%p257) target = $region28
      $region27: #{model_forward.3} parent=5 // pred_region
        // Predicated region
        $region29: #{model_forward.3} parent=27 // pred_check
          %p260 = pneg %p57
        $region30: #{model_forward.3} parent=27 // pred_check_branch
          %262 = sbr.rel (%p260) target = $region32
        $region31: #{model_forward.3} parent=27 // pred_region
          %s263 = sand.u32 %s47, 1
          %s264 = scalar_lea.sflag [#allocation5], %s263
          %s265 = sand.u32 %s47, 1
          %s266 = smul.addr %s265, 8
          %s267 = scalar_lea.vmem [#allocation4], %s266
          %s268 = smul.u32 2, %s30
          %s270 = ssub.s32 128, 128
          %271 = vsyncadd %s264, %s270
          %s272 = smul.addr %s268, 2
          %s273 = sadd.s32 %s31, %s272
          %s274 = smul.addr %s273, 64
          %s275 = scalar_lea.hbm %s0, %s274
          %s276 = sshll.u32 %s267, 4
          %s277 = int_to_ptr.vmem [resolvable:$true] %s276
          %282 = dma.hbm_to_vmem [thread:$0]  %s275, 128, %s277, %s264, 128, 64, 4
        $region32: #{model_forward.3} parent=27 // pred_fallthru
          _
        // Predicated region
        $region33: #{model_forward.3} parent=27 // pred_check
          %p283 = pneg %p83
        $region34: #{model_forward.3} parent=27 // pred_check_branch
          %285 = sbr.rel (%p283) target = $region36
        $region35: #{model_forward.3} parent=27 // pred_region
          %s286 = sand.u32 %s23, 1
          %s287 = scalar_lea.sflag [#allocation8], %s286
          %s288 = sand.u32 %s73, 1
          %s289 = smul.addr %s288, 64
          %s290 = scalar_lea.vmem [#allocation7], %s289
          %s291 = smul.u32 16, %s31
          %s293 = ssub.s32 1024, 1024
          %294 = vsyncadd %s287, %s293
          %s295 = smul.addr %s291, 64
          %s296 = scalar_lea.hbm %s1, %s295
          %s297 = sshll.u32 %s290, 4
          %s298 = int_to_ptr.vmem [resolvable:$true] %s297
          %303 = dma.hbm_to_vmem [thread:$0]  %s296, 1024, %s298, %s287, 64, 64, 4
        $region36: #{model_forward.3} parent=27 // pred_fallthru
          _
        // Predicated region
        $region37: #{model_forward.3} parent=27 // pred_check
          %p304 = pneg %p109
        $region38: #{model_forward.3} parent=27 // pred_check_branch
          %306 = sbr.rel (%p304) target = $region40
        $region39: #{model_forward.3} parent=27 // pred_region
          %s307 = sand.u32 %s23, 1
          %s308 = scalar_lea.sflag [#allocation8], %s307
          %s309 = sand.u32 %s99, 1
          %s310 = smul.addr %s309, 8
          %s311 = scalar_lea.vmem [#allocation9], %s310
          %s312 = smul.u32 2, %s30
          %s314 = ssub.s32 128, 128
          %315 = vsyncadd %s308, %s314
          %s316 = smul.addr %s312, 64
          %s317 = scalar_lea.hbm %s2, %s316
          %s318 = sshll.u32 %s311, 4
          %s319 = int_to_ptr.vmem [resolvable:$true] %s318
          %324 = dma.hbm_to_vmem [thread:$0]  %s317, 128, %s319, %s308, 64, 64, 4
        $region40: #{model_forward.3} parent=27 // pred_fallthru
          _
      $region28: #{model_forward.3} parent=5 // pred_fallthru
        _
      %p325 = scmp.le.s32.totalorder 1, %s23
      %p326 = scmp.lt.s32.totalorder %s23, 5
      %p327 = pnand %p325, %p326
      %p328 = pneg %p327
      // Predicated region
      $region41: #{model_forward.3} parent=5 // pred_check
        _
      $region42: #{model_forward.3} parent=5 // pred_check_branch
        %330 = sbr.rel (%p327) target = $region44
      $region43: #{model_forward.3} parent=5 // pred_region
        %s331 = ssub.s32 %s23, 1
        %s332 = sand.u32 %s50, 1
        %s333 = scalar_lea.sflag [#allocation5], %s332
        %s334 = sand.u32 %s50, 1
        %s335 = smul.addr %s334, 8
        %s336 = scalar_lea.vmem [#allocation4], %s335
        // Predicated region
        $region45: #{model_forward.3} parent=43 // pred_check
          %p337 = pneg %p63
        $region46: #{model_forward.3} parent=43 // pred_check_branch
          %339 = sbr.rel (%p337) target = $region48
        $region47: #{model_forward.3} parent=43 // pred_region
          %340 = dma.done %s333, 128
        $region48: #{model_forward.3} parent=43 // pred_fallthru
          _
        %s341 = sand.u32 %s28, 1
        %s342 = scalar_lea.sflag [#allocation8], %s341
        %s343 = sand.u32 %s76, 1
        %s344 = smul.addr %s343, 64
        %s345 = scalar_lea.vmem [#allocation7], %s344
        // Predicated region
        $region49: #{model_forward.3} parent=43 // pred_check
          %p346 = pneg %p89
        $region50: #{model_forward.3} parent=43 // pred_check_branch
          %348 = sbr.rel (%p346) target = $region52
        $region51: #{model_forward.3} parent=43 // pred_region
          %349 = dma.done %s342, 1024
        $region52: #{model_forward.3} parent=43 // pred_fallthru
          _
        %s350 = sand.u32 %s28, 1
        %s351 = scalar_lea.sflag [#allocation8], %s350
        %s352 = sand.u32 %s102, 1
        %s353 = smul.addr %s352, 8
        %s354 = scalar_lea.vmem [#allocation9], %s353
        // Predicated region
        $region53: #{model_forward.3} parent=43 // pred_check
          %p355 = pneg %p115
        $region54: #{model_forward.3} parent=43 // pred_check_branch
          %357 = sbr.rel (%p355) target = $region56
        $region55: #{model_forward.3} parent=43 // pred_region
          %358 = dma.done %s351, 128
        $region56: #{model_forward.3} parent=43 // pred_fallthru
          _
        // Predicated region
        $region57: #{model_forward.3} parent=43 // pred_check
          %p359 = pneg %p136
        $region58: #{model_forward.3} parent=43 // pred_check_branch
          %361 = sbr.rel (%p359) target = $region60
        $region59: #{model_forward.3} parent=43 // pred_region
          %362 = dma.done [#allocation11], 1024
        $region60: #{model_forward.3} parent=43 // pred_fallthru
          _
        // Predicated region
        $region61: #{model_forward.3} parent=43 // pred_check
          %p363 = pneg %p157
        $region62: #{model_forward.3} parent=43 // pred_check_branch
          %365 = sbr.rel (%p363) target = $region64
        $region63: #{model_forward.3} parent=43 // pred_region
          %366 = dma.done [#allocation11], 1024
        $region64: #{model_forward.3} parent=43 // pred_fallthru
          _
        // Predicated region
        $region65: #{model_forward.3} parent=43 // pred_check
          %p367 = pneg %p178
        $region66: #{model_forward.3} parent=43 // pred_check_branch
          %369 = sbr.rel (%p367) target = $region68
        $region67: #{model_forward.3} parent=43 // pred_region
          %370 = dma.done [#allocation14], 16
        $region68: #{model_forward.3} parent=43 // pred_fallthru
          _
        %s371 = sand.u32 %s50, 1
        %s372 = scalar_lea.sflag [#allocation5], %s371
        %s373 = sand.u32 %s50, 1
        %s374 = smul.addr %s373, 8
        %s375 = scalar_lea.vmem [#allocation4], %s374
        %p376 = pneg %p63
        %p377 = pneg %p60
        %s378 = sand.u32 %s28, 1
        %s379 = scalar_lea.sflag [#allocation8], %s378
        %s380 = sand.u32 %s76, 1
        %s381 = smul.addr %s380, 64
        %s382 = scalar_lea.vmem [#allocation7], %s381
        %p383 = pneg %p89
        %p384 = pneg %p86
        %s385 = sand.u32 %s28, 1
        %s386 = scalar_lea.sflag [#allocation8], %s385
        %s387 = sand.u32 %s102, 1
        %s388 = smul.addr %s387, 8
        %s389 = scalar_lea.vmem [#allocation9], %s388
        %p390 = pneg %p115
        %p391 = pneg %p112
        %p392 = pneg %p136
        %p393 = pneg %p133
        %p394 = pneg %p157
        %p395 = pneg %p154
        %p396 = pneg %p178
        %p397 = pneg %p175
        %p398 = pneg %p204
        %p399 = pneg %p201
        %s400 = sand.u32 %s191, 1
        %s401 = scalar_lea.sflag [#allocation6], %s400
        %s402 = sand.u32 %s191, 1
        %s403 = smul.addr %s402, 16
        %s404 = scalar_lea.vmem [#allocation15], %s403
        %s405 = smul.u32 2, %s32
        %s406 = smul.u32 16, %s33
        %s407 = smul.u32 2, %s32
        %s408 = smul.u32 2, %s32
        %p410 = scmp.eq.s32.totalorder %s33, 0
        // Predicated region
        $region69: #{model_forward.3} parent=43 // pred_check
          %p411 = pneg %p410
        $region70: #{model_forward.3} parent=43 // pred_check_branch
          %413 = sbr.rel (%p411) target = $region72
        $region71: #{model_forward.3} parent=43 // pred_region
          %414 = vst [vmem:[#allocation2] sm:$0xff] 0.0
          %415 = vst [vmem:[#allocation2 + $0x8] sm:$0xff] 0.0
          %v416 = vld [vmem:[%s354] sm:$0xf]
          %v417 = vld [vmem:[%s354 + $0x4] sm:$0xf]
          %v418 = vld [vmem:[#allocation10] sm:$0xf]
          %v419 = vld [vmem:[#allocation10 + $0x4] sm:$0xf]
          %v420 = vld [vmem:[#allocation10 + $0x8] sm:$0xf]
          %v421 = vld [vmem:[#allocation10 + $0xc] sm:$0xf]
          %v422 = vld [vmem:[#allocation10 + $0x10] sm:$0xf]
          %v423 = vld [vmem:[#allocation10 + $0x14] sm:$0xf]
          %v424 = vld [vmem:[#allocation10 + $0x18] sm:$0xf]
          %v425 = vld [vmem:[#allocation10 + $0x1c] sm:$0xf]
          %v426 = vld [vmem:[#allocation10 + $0x20] sm:$0xf]
          %v427 = vld [vmem:[#allocation10 + $0x24] sm:$0xf]
          %v428 = vld [vmem:[#allocation10 + $0x28] sm:$0xf]
          %v429 = vld [vmem:[#allocation10 + $0x2c] sm:$0xf]
          %v430 = vld [vmem:[#allocation10 + $0x30] sm:$0xf]
          %v431 = vld [vmem:[#allocation10 + $0x34] sm:$0xf]
          %v432 = vld [vmem:[#allocation10 + $0x38] sm:$0xf]
          %v433 = vld [vmem:[#allocation10 + $0x3c] sm:$0xf]
          %v434 = vld [vmem:[#allocation13] sm:$0x1]
          %v436 = vlaneseq
          %v437 = vshrl.u32 %v436, 7
          %v438 = vsub.s32 0, %v437
          %v439 = vrot.slane %v434, %v438
          %v443 = vunpack.c.l.b16 %v416
          %v444 = vunpack.c.l.b16 %v417
          %v445 = vpack.c.b16 %v444, %v443
          %v463 = vunpack.c.l.b16 %v418
          %v464 = vunpack.c.l.b16 %v419
          %v465 = vunpack.c.l.b16 %v420
          %v466 = vunpack.c.l.b16 %v421
          %v467 = vunpack.c.l.b16 %v422
          %v468 = vunpack.c.l.b16 %v423
          %v469 = vunpack.c.l.b16 %v424
          %v470 = vunpack.c.l.b16 %v425
          %v471 = vunpack.c.l.b16 %v426
          %v472 = vunpack.c.l.b16 %v427
          %v473 = vunpack.c.l.b16 %v428
          %v474 = vunpack.c.l.b16 %v429
          %v475 = vunpack.c.l.b16 %v430
          %v476 = vunpack.c.l.b16 %v431
          %v477 = vunpack.c.l.b16 %v432
          %v478 = vunpack.c.l.b16 %v433
          %v479 = vpack.c.b16 %v464, %v463
          %v480 = vpack.c.b16 %v466, %v465
          %v481 = vpack.c.b16 %v468, %v467
          %v482 = vpack.c.b16 %v470, %v469
          %v483 = vpack.c.b16 %v472, %v471
          %v484 = vpack.c.b16 %v474, %v473
          %v485 = vpack.c.b16 %v476, %v475
          %v486 = vpack.c.b16 %v478, %v477
          %495 = vmatprep.subr.bf16.mxu0 0
          %496 = vmatpush1.bf16.msra.mxu0 %v479
          %497 = vmatprep.subr.bf16.mxu0 0
          %498 = vmatpush1.bf16.msra.mxu0 %v480
          %499 = vmatprep.subr.bf16.mxu0 0
          %500 = vmatpush1.bf16.msra.mxu0 %v481
          %501 = vmatprep.subr.bf16.mxu0 0
          %502 = vmatpush1.bf16.msra.mxu0 %v482
          %503 = vmatprep.subr.bf16.mxu0 0
          %504 = vmatpush1.bf16.msra.mxu0 %v483
          %505 = vmatprep.subr.bf16.mxu0 0
          %506 = vmatpush1.bf16.msra.mxu0 %v484
          %507 = vmatprep.subr.bf16.mxu0 0
          %508 = vmatpush1.bf16.msra.mxu0 %v485
          %509 = vmatprep.subr.bf16.mxu0 0
          %510 = vmatpush1.bf16.msra.mxu0 %v486
          %511 = vmatprep.subr.bf16.mxu0 0
          %512 = vmatpush1.bf16.msra.mxu0 0
          %513 = vmatprep.subr.bf16.mxu0 0
          %514 = vmatpush1.bf16.msra.mxu0 0
          %515 = vmatprep.subr.bf16.mxu0 0
          %516 = vmatpush1.bf16.msra.mxu0 0
          %517 = vmatprep.subr.bf16.mxu0 0
          %518 = vmatpush1.bf16.msra.mxu0 0
          %519 = vmatprep.subr.bf16.mxu0 0
          %520 = vmatpush1.bf16.msra.mxu0 0
          %521 = vmatprep.subr.bf16.mxu0 0
          %522 = vmatpush1.bf16.msra.mxu0 0
          %523 = vmatprep.subr.bf16.mxu0 0
          %524 = vmatpush1.bf16.msra.mxu0 0
          %525 = vmatprep.subr.bf16.mxu0 0
          %526 = vmatpush1.bf16.msra.mxu0 0
          %527 = vmatprep.mubr.bf16.mxu0 0
          %528 = vmatmul.mubr.bf16.gmra.mrb[0].mxu0 %v445
          %v529 = vpop.f32.mrb[0].mxu0
          %v530 = vadd.f32 %v439, %v529
          %v531 = vpop.f32.mrb[0].mxu0
          %v532 = vpop.f32.mrb[0].mxu0
          %v533 = vadd.f32 %v439, %v532
          %v534 = vpop.f32.mrb[0].mxu0
          %535 = vdwg.mxu0
          %536 = vst [vmem:[#allocation3] sm:$0xff] %v530
          %537 = vst [vmem:[#allocation3 + $0x8] sm:$0xff] %v533
        $region72: #{model_forward.3} parent=43 // pred_fallthru
          _
        %v538 = vld [vmem:[#allocation2] sm:$0xff]
        %v539 = vld [vmem:[#allocation2 + $0x8] sm:$0xff]
        %v540 = vld [vmem:[%s336] sm:$0xf]
        %v541 = vld [vmem:[%s336 + $0x4] sm:$0xf]
        %v542 = vld [vmem:[%s345] sm:$0xf]
        %v543 = vld [vmem:[%s345 + $0x4] sm:$0xf]
        %v544 = vld [vmem:[%s345 + $0x8] sm:$0xf]
        %v545 = vld [vmem:[%s345 + $0xc] sm:$0xf]
        %v546 = vld [vmem:[%s345 + $0x10] sm:$0xf]
        %v547 = vld [vmem:[%s345 + $0x14] sm:$0xf]
        %v548 = vld [vmem:[%s345 + $0x18] sm:$0xf]
        %v549 = vld [vmem:[%s345 + $0x1c] sm:$0xf]
        %v550 = vld [vmem:[%s345 + $0x20] sm:$0xf]
        %v551 = vld [vmem:[%s345 + $0x24] sm:$0xf]
        %v552 = vld [vmem:[%s345 + $0x28] sm:$0xf]
        %v553 = vld [vmem:[%s345 + $0x2c] sm:$0xf]
        %v554 = vld [vmem:[%s345 + $0x30] sm:$0xf]
        %v555 = vld [vmem:[%s345 + $0x34] sm:$0xf]
        %v556 = vld [vmem:[%s345 + $0x38] sm:$0xf]
        %v557 = vld [vmem:[%s345 + $0x3c] sm:$0xf]
        %v560 = vunpack.c.l.b16 %v540
        %v561 = vunpack.c.l.b16 %v541
        %v562 = vpack.c.b16 %v561, %v560
        %v580 = vunpack.c.l.b16 %v542
        %v581 = vunpack.c.l.b16 %v543
        %v582 = vunpack.c.l.b16 %v544
        %v583 = vunpack.c.l.b16 %v545
        %v584 = vunpack.c.l.b16 %v546
        %v585 = vunpack.c.l.b16 %v547
        %v586 = vunpack.c.l.b16 %v548
        %v587 = vunpack.c.l.b16 %v549
        %v588 = vunpack.c.l.b16 %v550
        %v589 = vunpack.c.l.b16 %v551
        %v590 = vunpack.c.l.b16 %v552
        %v591 = vunpack.c.l.b16 %v553
        %v592 = vunpack.c.l.b16 %v554
        %v593 = vunpack.c.l.b16 %v555
        %v594 = vunpack.c.l.b16 %v556
        %v595 = vunpack.c.l.b16 %v557
        %v596 = vpack.c.b16 %v581, %v580
        %v597 = vpack.c.b16 %v583, %v582
        %v598 = vpack.c.b16 %v585, %v584
        %v599 = vpack.c.b16 %v587, %v586
        %v600 = vpack.c.b16 %v589, %v588
        %v601 = vpack.c.b16 %v591, %v590
        %v602 = vpack.c.b16 %v593, %v592
        %v603 = vpack.c.b16 %v595, %v594
        %612 = vmatprep.subr.bf16.mxu0 0
        %613 = vmatpush1.bf16.msra.mxu0 %v596
        %614 = vmatprep.subr.bf16.mxu0 0
        %615 = vmatpush1.bf16.msra.mxu0 %v597
        %616 = vmatprep.subr.bf16.mxu0 0
        %617 = vmatpush1.bf16.msra.mxu0 %v598
        %618 = vmatprep.subr.bf16.mxu0 0
        %619 = vmatpush1.bf16.msra.mxu0 %v599
        %620 = vmatprep.subr.bf16.mxu0 0
        %621 = vmatpush1.bf16.msra.mxu0 %v600
        %622 = vmatprep.subr.bf16.mxu0 0
        %623 = vmatpush1.bf16.msra.mxu0 %v601
        %624 = vmatprep.subr.bf16.mxu0 0
        %625 = vmatpush1.bf16.msra.mxu0 %v602
        %626 = vmatprep.subr.bf16.mxu0 0
        %627 = vmatpush1.bf16.msra.mxu0 %v603
        %628 = vmatprep.subr.bf16.mxu0 0
        %629 = vmatpush1.bf16.msra.mxu0 0
        %630 = vmatprep.subr.bf16.mxu0 0
        %631 = vmatpush1.bf16.msra.mxu0 0
        %632 = vmatprep.subr.bf16.mxu0 0
        %633 = vmatpush1.bf16.msra.mxu0 0
        %634 = vmatprep.subr.bf16.mxu0 0
        %635 = vmatpush1.bf16.msra.mxu0 0
        %636 = vmatprep.subr.bf16.mxu0 0
        %637 = vmatpush1.bf16.msra.mxu0 0
        %638 = vmatprep.subr.bf16.mxu0 0
        %639 = vmatpush1.bf16.msra.mxu0 0
        %640 = vmatprep.subr.bf16.mxu0 0
        %641 = vmatpush1.bf16.msra.mxu0 0
        %642 = vmatprep.subr.bf16.mxu0 0
        %643 = vmatpush1.bf16.msra.mxu0 0
        %644 = vmatprep.mubr.bf16.mxu0 0
        %645 = vmatmul.mubr.bf16.gmra.mrb[0].mxu0 %v562
        %v646 = vpop.f32.mrb[0].mxu0
        %v647 = vadd.f32 0.0, %v646
        %v648 = vpop.f32.mrb[0].mxu0
        %v649 = vpop.f32.mrb[0].mxu0
        %v650 = vadd.f32 0.0, %v649
        %v651 = vpop.f32.mrb[0].mxu0
        %652 = vdwg.mxu0
        %v653 = vadd.f32 %v538, %v647
        %v654 = vadd.f32 %v539, %v650
        %655 = vst [vmem:[#allocation2] sm:$0xff] %v653
        %656 = vst [vmem:[#allocation2 + $0x8] sm:$0xff] %v654
        %p657 = scmp.eq.s32.totalorder %s33, 1
        // Predicated region
        $region73: #{model_forward.3} parent=43 // pred_check
          %p658 = pneg %p657
        $region74: #{model_forward.3} parent=43 // pred_check_branch
          %660 = sbr.rel (%p658) target = $region76
        $region75: #{model_forward.3} parent=43 // pred_region
          %v661 = vld [vmem:[#allocation3] sm:$0xff]
          %v662 = vld [vmem:[#allocation3 + $0x8] sm:$0xff]
          %v663 = vld [vmem:[#allocation2] sm:$0xff]
          %v664 = vld [vmem:[#allocation2 + $0x8] sm:$0xff]
          %v665 = vpack.c.bf16 %v664, %v663
          %v666 = vld [vmem:[#allocation12] sm:$0xf]
          %v667 = vld [vmem:[#allocation12 + $0x4] sm:$0xf]
          %v668 = vld [vmem:[#allocation12 + $0x8] sm:$0xf]
          %v669 = vld [vmem:[#allocation12 + $0xc] sm:$0xf]
          %v670 = vld [vmem:[#allocation12 + $0x10] sm:$0xf]
          %v671 = vld [vmem:[#allocation12 + $0x14] sm:$0xf]
          %v672 = vld [vmem:[#allocation12 + $0x18] sm:$0xf]
          %v673 = vld [vmem:[#allocation12 + $0x1c] sm:$0xf]
          %v674 = vld [vmem:[#allocation12 + $0x20] sm:$0xf]
          %v675 = vld [vmem:[#allocation12 + $0x24] sm:$0xf]
          %v676 = vld [vmem:[#allocation12 + $0x28] sm:$0xf]
          %v677 = vld [vmem:[#allocation12 + $0x2c] sm:$0xf]
          %v678 = vld [vmem:[#allocation12 + $0x30] sm:$0xf]
          %v679 = vld [vmem:[#allocation12 + $0x34] sm:$0xf]
          %v680 = vld [vmem:[#allocation12 + $0x38] sm:$0xf]
          %v681 = vld [vmem:[#allocation12 + $0x3c] sm:$0xf]
          %v698 = vunpack.c.l.b16 %v666
          %v699 = vunpack.c.l.b16 %v667
          %v700 = vunpack.c.l.b16 %v668
          %v701 = vunpack.c.l.b16 %v669
          %v702 = vunpack.c.l.b16 %v670
          %v703 = vunpack.c.l.b16 %v671
          %v704 = vunpack.c.l.b16 %v672
          %v705 = vunpack.c.l.b16 %v673
          %v706 = vunpack.c.l.b16 %v674
          %v707 = vunpack.c.l.b16 %v675
          %v708 = vunpack.c.l.b16 %v676
          %v709 = vunpack.c.l.b16 %v677
          %v710 = vunpack.c.l.b16 %v678
          %v711 = vunpack.c.l.b16 %v679
          %v712 = vunpack.c.l.b16 %v680
          %v713 = vunpack.c.l.b16 %v681
          %v714 = vpack.c.b16 %v699, %v698
          %v715 = vpack.c.b16 %v701, %v700
          %v716 = vpack.c.b16 %v703, %v702
          %v717 = vpack.c.b16 %v705, %v704
          %v718 = vpack.c.b16 %v707, %v706
          %v719 = vpack.c.b16 %v709, %v708
          %v720 = vpack.c.b16 %v711, %v710
          %v721 = vpack.c.b16 %v713, %v712
          %730 = vmatprep.subr.bf16.mxu0 0
          %731 = vmatpush1.bf16.msra.mxu0 %v714
          %732 = vmatprep.subr.bf16.mxu0 0
          %733 = vmatpush1.bf16.msra.mxu0 %v715
          %734 = vmatprep.subr.bf16.mxu0 0
          %735 = vmatpush1.bf16.msra.mxu0 %v716
          %736 = vmatprep.subr.bf16.mxu0 0
          %737 = vmatpush1.bf16.msra.mxu0 %v717
          %738 = vmatprep.subr.bf16.mxu0 0
          %739 = vmatpush1.bf16.msra.mxu0 %v718
          %740 = vmatprep.subr.bf16.mxu0 0
          %741 = vmatpush1.bf16.msra.mxu0 %v719
          %742 = vmatprep.subr.bf16.mxu0 0
          %743 = vmatpush1.bf16.msra.mxu0 %v720
          %744 = vmatprep.subr.bf16.mxu0 0
          %745 = vmatpush1.bf16.msra.mxu0 %v721
          %746 = vmatprep.subr.bf16.mxu0 0
          %747 = vmatpush1.bf16.msra.mxu0 0
          %748 = vmatprep.subr.bf16.mxu0 0
          %749 = vmatpush1.bf16.msra.mxu0 0
          %750 = vmatprep.subr.bf16.mxu0 0
          %751 = vmatpush1.bf16.msra.mxu0 0
          %752 = vmatprep.subr.bf16.mxu0 0
          %753 = vmatpush1.bf16.msra.mxu0 0
          %754 = vmatprep.subr.bf16.mxu0 0
          %755 = vmatpush1.bf16.msra.mxu0 0
          %756 = vmatprep.subr.bf16.mxu0 0
          %757 = vmatpush1.bf16.msra.mxu0 0
          %758 = vmatprep.subr.bf16.mxu0 0
          %759 = vmatpush1.bf16.msra.mxu0 0
          %760 = vmatprep.subr.bf16.mxu0 0
          %761 = vmatpush1.bf16.msra.mxu0 0
          %762 = vmatprep.mubr.bf16.mxu0 0
          %763 = vmatmul.mubr.bf16.gmra.mrb[0].mxu0 %v665
          %v764 = vpop.f32.mrb[0].mxu0
          %v765 = vadd.f32 0.0, %v764
          %v766 = vpop.f32.mrb[0].mxu0
          %v767 = vpop.f32.mrb[0].mxu0
          %v768 = vadd.f32 0.0, %v767
          %v769 = vpop.f32.mrb[0].mxu0
          %770 = vdwg.mxu0
          %v771 = vadd.f32 %v661, %v765
          %v772 = vadd.f32 %v662, %v768
          %773 = vst [vmem:[%s404] sm:$0xff] %v771
          %774 = vst [vmem:[%s404 + $0x8] sm:$0xff] %v772
        $region76: #{model_forward.3} parent=43 // pred_fallthru
          _
        %s775 = sand.u32 %s191, 1
        %s776 = scalar_lea.sflag [#allocation6], %s775
        %s777 = sand.u32 %s191, 1
        %s778 = smul.addr %s777, 16
        %s779 = scalar_lea.vmem [#allocation15], %s778
        // Predicated region
        $region77: #{model_forward.3} parent=43 // pred_check
          %p780 = pneg %p201
        $region78: #{model_forward.3} parent=43 // pred_check_branch
          %782 = sbr.rel (%p780) target = $region80
        $region79: #{model_forward.3} parent=43 // pred_region
          %s783 = smul.u32 2, %s32
          %s785 = ssub.s32 256, 256
          %786 = vsyncadd %s776, %s785
          %s787 = smul.addr %s783, 128
          %s788 = scalar_lea.hbm %s6, %s787
          %s789 = sshll.u32 %s779, 4
          %s790 = int_to_ptr.vmem [resolvable:$true] %s789
          %795 = dma.vmem_to_hbm [thread:$0]  %s790, 256, %s788, %s776, 128, 128, 8
        $region80: #{model_forward.3} parent=43 // pred_fallthru
          _
      $region44: #{model_forward.3} parent=5 // pred_fallthru
        _
      %p796 = scmp.le.s32.totalorder 2, %s23
      // Predicated region
      $region81: #{model_forward.3} parent=5 // pred_check
        %p797 = pneg %p796
      $region82: #{model_forward.3} parent=5 // pred_check_branch
        %799 = sbr.rel (%p797) target = $region84
      $region83: #{model_forward.3} parent=5 // pred_region
        %s800 = ssub.s32 %s23, 2
        // Predicated region
        $region85: #{model_forward.3} parent=83 // pred_check
          %p801 = pneg %p207
        $region86: #{model_forward.3} parent=83 // pred_check_branch
          %803 = sbr.rel (%p801) target = $region88
        $region87: #{model_forward.3} parent=83 // pred_region
          %s804 = sand.u32 %s192, 1
          %s805 = scalar_lea.sflag [#allocation6], %s804
          %s806 = sand.u32 %s192, 1
          %s807 = smul.addr %s806, 16
          %s808 = scalar_lea.vmem [#allocation15], %s807
          %809 = dma.done %s805, 256
        $region88: #{model_forward.3} parent=83 // pred_fallthru
          _
      $region84: #{model_forward.3} parent=5 // pred_fallthru
        _
    $region6: #{model_forward.3} parent=1 // loop_footer
      %s27 = sadd.s32 1, %s23
    $region7: #{model_forward.3} parent=1 // loop_footer_branch
      %22 = sbr.rel target = $region3
    $region8: #{model_forward.3} parent=1 // loop_exit
      _
    %810 = vsyncpa [#allocation5], 1
    %s811 = scalar_lea.sflag [#allocation5], 1
    %812 = vsyncpa %s811, 1
    %813 = vsyncpa [#allocation8], 1
    %s814 = scalar_lea.sflag [#allocation8], 1
    %815 = vsyncpa %s814, 1
    %816 = vsyncpa [#allocation11], 1
    %817 = vsyncpa [#allocation14], 1
    %818 = vsyncpa [#allocation6], 1
    %s819 = scalar_lea.sflag [#allocation6], 1
    %820 = vsyncpa %s819, 1

// kernel: model_forward.2
$region0: #{model_forward.2}
  #allocation0 [shape = 'u32[]', space=smem, size = 0x4, offset = 0x4, fixed_abs, tag = 'smem constant byte address 0x4 - core index']
  #allocation1 [shape = 'u32[144,128]{1,0:T(1,128)}', space=vmem, size = 0x12000, scoped, tag = 'internal scratch']
  #allocation2 [shape = 'f32[64,128]{1,0:T(8,128)}', space=vmem, size = 0x8000, scoped, tag = 'scratch operand']
  #allocation3 [shape = 'f32[64,128]{1,0:T(8,128)}', space=vmem, size = 0x8000, scoped, tag = 'scratch operand']
  %s0 = inlined_call_operand.hbm [shape: bf16[256,384], index: 0, kind: input, shape index: {}]
  %s1 = inlined_call_operand.hbm [shape: bf16[384,128], index: 1, kind: input, shape index: {}, may-alias: {1,2}]
  %s2 = inlined_call_operand.hbm [shape: bf16[384,128], index: 2, kind: input, shape index: {}, may-alias: {1,2}]
  %s3 = inlined_call_operand.hbm [shape: bf16[128,128], index: 3, kind: input, shape index: {}]
  %s4 = inlined_call_operand.hbm [shape: bf16[128,128], index: 4, kind: input, shape index: {}]
  %s5 = inlined_call_operand.hbm [shape: f32[1,128], index: 5, kind: input, shape index: {}]
  %s6 = inlined_call_operand.hbm [shape: bf16[256,128], index: 6, kind: output, shape index: {}]
  %s7 = sld [smem:[#allocation0]]
  $region89: #{model_forward.2} parent=0
    _
  %s9 = ssub.s32 1, %s7
  %s10 = scalar_select 0, %s9, %s7
  $region1: #{model_forward.2} parent=0
    #allocation4 [shape = 'u8[32768]{0}', space=vmem, size = 0x8000, scoped, tag = 'input window, operand 0']
    #allocation5 [shape = 's32[2]{0}', space=sflag, size = 0x8, scoped, tag = 'scoped memory for model_forward.2']
    #allocation6 [shape = 's32[2]{0}', space=sflag, size = 0x8, scoped, tag = 'scoped memory for model_forward.2']
    #allocation7 [shape = 'u8[65536]{0}', space=vmem, size = 0x10000, scoped, tag = 'input window, operand 1']
    #allocation8 [shape = 's32[2]{0}', space=sflag, size = 0x8, scoped, tag = 'scoped memory for model_forward.2']
    #allocation9 [shape = 'u8[32768]{0}', space=vmem, size = 0x8000, scoped, tag = 'input window, operand 2']
    #allocation10 [shape = 'u8[32768]{0}', space=vmem, size = 0x8000, scoped, tag = 'input window, operand 3, single buffered']
    #allocation11 [shape = 's32[1]{0}', space=sflag, size = 0x4, scoped, tag = 'scoped memory for model_forward.2']
    #allocation12 [shape = 'u8[32768]{0}', space=vmem, size = 0x8000, scoped, tag = 'input window, operand 4, single buffered']
    #allocation13 [shape = 'u8[512]{0}', space=vmem, size = 0x400, scoped, tag = 'input window, operand 5, single buffered']
    #allocation14 [shape = 's32[1]{0}', space=sflag, size = 0x4, scoped, tag = 'scoped memory for model_forward.2']
    #allocation15 [shape = 'u8[32768]{0}', space=vmem, size = 0x8000, scoped, tag = 'output window, operand 0']
    %11 = vsyncpa [#allocation5], 0
    %s12 = scalar_lea.sflag [#allocation5], 1
    %13 = vsyncpa %s12, 0
    %14 = vsyncpa [#allocation8], 0
    %s15 = scalar_lea.sflag [#allocation8], 1
    %16 = vsyncpa %s15, 0
    %17 = vsyncpa [#allocation11], 0
    %18 = vsyncpa [#allocation14], 0
    %19 = vsyncpa [#allocation6], 0
    %s20 = scalar_lea.sflag [#allocation6], 1
    %21 = vsyncpa %s20, 0
    loop: start=0, step=1, limit=14
    $region2: #{model_forward.2} parent=1 // loop_pre_header
      _
    $region3: #{model_forward.2} parent=1 // loop_header
      %s23 = sphi 0, %s27
      %p24 = scmp.ge.s32.totalorder %s23, 14
      %s30 = sphi 0, %s42
      %s31 = sphi 0, %s38
      %s32 = sphi 0, %s30
      %s33 = sphi 0, %s31
      %s34 = sphi 0, %s32
      %s35 = sphi 0, %s33
      %s47 = sphi 0, %s49
      %s50 = sphi 0, %s47
      %s51 = sphi 0, %s50
      %s67 = sphi 0, %s51
      %s73 = sphi 0, %s75
      %s76 = sphi 0, %s73
      %s77 = sphi 0, %s76
      %s93 = sphi 0, %s77
      %s99 = sphi 0, %s101
      %s102 = sphi 0, %s99
      %s103 = sphi 0, %s102
      %s119 = sphi 0, %s103
      %s123 = sphi 0, %s123
      %s125 = sphi 0, %s123
      %s126 = sphi 0, %s125
      %s140 = sphi 0, %s126
      %s144 = sphi 0, %s144
      %s146 = sphi 0, %s144
      %s147 = sphi 0, %s146
      %s161 = sphi 0, %s147
      %s165 = sphi 0, %s165
      %s167 = sphi 0, %s165
      %s168 = sphi 0, %s167
      %s182 = sphi 0, %s168
      %s188 = sphi 0, %s190
      %s191 = sphi 0, %s188
      %s192 = sphi 0, %s191
      %s208 = sphi 0, %s192
    $region4: #{model_forward.2} parent=1 // loop_header_branch
      %26 = sbr.rel (%p24) target = $region8
    $region5: #{model_forward.2} parent=1 // loop_body
      %s28 = ssub.s32 %s23, 1
      %s29 = ssub.s32 %s23, 2
      %s36 = sadd.s32 1, %s31
      %p37 = scmp.ge.s32.totalorder %s36, 3
      %s38 = scalar_select %p37, 0, %s36
      %s39 = sadd.s32 1, %s30
      %s40 = scalar_select %p37, %s39, %s30
      %p41 = scmp.ge.s32.totalorder %s40, 4
      %s42 = scalar_select %p41, 0, %s40
      %s43 = ssub.s32 %s30, %s42
      %s44 = ssub.s32 %s31, %s38
      %s45 = sor.u32 %s43, %s44
      %p46 = scmp.eq.s32.totalorder %s45, 0
      %s48 = sadd.s32 %s47, 1
      %s49 = scalar_select %p46, %s47, %s48
      %p52 = pneg %p46
      %p53 = scmp.eq.s32.totalorder %s23, 11
      %p54 = por %p52, %p53
      %p55 = scmp.ne.s32.totalorder %s47, %s50
      %p56 = scmp.eq.s32.totalorder %s23, 0
      %p57 = por %p55, %p56
      %p58 = scmp.ne.s32.totalorder %s47, %s50
      %p59 = scmp.eq.s32.totalorder %s28, 11
      %p60 = por %p58, %p59
      %p61 = scmp.ne.s32.totalorder %s50, %s51
      %p62 = scmp.eq.s32.totalorder %s28, 0
      %p63 = por %p61, %p62
      %p64 = scmp.ne.s32.totalorder %s50, %s51
      %p65 = scmp.eq.s32.totalorder %s29, 11
      %p66 = por %p64, %p65
      %p68 = scmp.ne.s32.totalorder %s51, %s67
      %p69 = scmp.eq.s32.totalorder %s29, 0
      %p70 = por %p68, %p69
      %s71 = ssub.s32 %s31, %s38
      %p72 = scmp.eq.s32.totalorder %s71, 0
      %s74 = sadd.s32 %s73, 1
      %s75 = scalar_select %p72, %s73, %s74
      %p78 = pneg %p72
      %p79 = scmp.eq.s32.totalorder %s23, 11
      %p80 = por %p78, %p79
      %p81 = scmp.ne.s32.totalorder %s73, %s76
      %p82 = scmp.eq.s32.totalorder %s23, 0
      %p83 = por %p81, %p82
      %p84 = scmp.ne.s32.totalorder %s73, %s76
      %p85 = scmp.eq.s32.totalorder %s28, 11
      %p86 = por %p84, %p85
      %p87 = scmp.ne.s32.totalorder %s76, %s77
      %p88 = scmp.eq.s32.totalorder %s28, 0
      %p89 = por %p87, %p88
      %p90 = scmp.ne.s32.totalorder %s76, %s77
      %p91 = scmp.eq.s32.totalorder %s29, 11
      %p92 = por %p90, %p91
      %p94 = scmp.ne.s32.totalorder %s77, %s93
      %p95 = scmp.eq.s32.totalorder %s29, 0
      %p96 = por %p94, %p95
      %s97 = ssub.s32 %s30, %s42
      %p98 = scmp.eq.s32.totalorder %s97, 0
      %s100 = sadd.s32 %s99, 1
      %s101 = scalar_select %p98, %s99, %s100
      %p104 = pneg %p98
      %p105 = scmp.eq.s32.totalorder %s23, 11
      %p106 = por %p104, %p105
      %p107 = scmp.ne.s32.totalorder %s99, %s102
      %p108 = scmp.eq.s32.totalorder %s23, 0
      %p109 = por %p107, %p108
      %p110 = scmp.ne.s32.totalorder %s99, %s102
      %p111 = scmp.eq.s32.totalorder %s28, 11
      %p112 = por %p110, %p111
      %p113 = scmp.ne.s32.totalorder %s102, %s103
      %p114 = scmp.eq.s32.totalorder %s28, 0
      %p115 = por %p113, %p114
      %p116 = scmp.ne.s32.totalorder %s102, %s103
      %p117 = scmp.eq.s32.totalorder %s29, 11
      %p118 = por %p116, %p117
      %p120 = scmp.ne.s32.totalorder %s103, %s119
      %p121 = scmp.eq.s32.totalorder %s29, 0
      %p122 = por %p120, %p121
      %s124 = sadd.s32 %s123, 1
      %p127 = scmp.eq.s32.totalorder %s23, 11
      %p128 = scmp.ne.s32.totalorder %s123, %s125
      %p129 = scmp.eq.s32.totalorder %s23, 0
      %p130 = por %p128, %p129
      %p131 = scmp.ne.s32.totalorder %s123, %s125
      %p132 = scmp.eq.s32.totalorder %s28, 11
      %p133 = por %p131, %p132
      %p134 = scmp.ne.s32.totalorder %s125, %s126
      %p135 = scmp.eq.s32.totalorder %s28, 0
      %p136 = por %p134, %p135
      %p137 = scmp.ne.s32.totalorder %s125, %s126
      %p138 = scmp.eq.s32.totalorder %s29, 11
      %p139 = por %p137, %p138
      %p141 = scmp.ne.s32.totalorder %s126, %s140
      %p142 = scmp.eq.s32.totalorder %s29, 0
      %p143 = por %p141, %p142
      %s145 = sadd.s32 %s144, 1
      %p148 = scmp.eq.s32.totalorder %s23, 11
      %p149 = scmp.ne.s32.totalorder %s144, %s146
      %p150 = scmp.eq.s32.totalorder %s23, 0
      %p151 = por %p149, %p150
      %p152 = scmp.ne.s32.totalorder %s144, %s146
      %p153 = scmp.eq.s32.totalorder %s28, 11
      %p154 = por %p152, %p153
      %p155 = scmp.ne.s32.totalorder %s146, %s147
      %p156 = scmp.eq.s32.totalorder %s28, 0
      %p157 = por %p155, %p156
      %p158 = scmp.ne.s32.totalorder %s146, %s147
      %p159 = scmp.eq.s32.totalorder %s29, 11
      %p160 = por %p158, %p159
      %p162 = scmp.ne.s32.totalorder %s147, %s161
      %p163 = scmp.eq.s32.totalorder %s29, 0
      %p164 = por %p162, %p163
      %s166 = sadd.s32 %s165, 1
      %p169 = scmp.eq.s32.totalorder %s23, 11
      %p170 = scmp.ne.s32.totalorder %s165, %s167
      %p171 = scmp.eq.s32.totalorder %s23, 0
      %p172 = por %p170, %p171
      %p173 = scmp.ne.s32.totalorder %s165, %s167
      %p174 = scmp.eq.s32.totalorder %s28, 11
      %p175 = por %p173, %p174
      %p176 = scmp.ne.s32.totalorder %s167, %s168
      %p177 = scmp.eq.s32.totalorder %s28, 0
      %p178 = por %p176, %p177
      %p179 = scmp.ne.s32.totalorder %s167, %s168
      %p180 = scmp.eq.s32.totalorder %s29, 11
      %p181 = por %p179, %p180
      %p183 = scmp.ne.s32.totalorder %s168, %s182
      %p184 = scmp.eq.s32.totalorder %s29, 0
      %p185 = por %p183, %p184
      %s186 = ssub.s32 %s30, %s42
      %p187 = scmp.eq.s32.totalorder %s186, 0
      %s189 = sadd.s32 %s188, 1
      %s190 = scalar_select %p187, %s188, %s189
      %p193 = pneg %p187
      %p194 = scmp.eq.s32.totalorder %s23, 11
      %p195 = por %p193, %p194
      %p196 = scmp.ne.s32.totalorder %s188, %s191
      %p197 = scmp.eq.s32.totalorder %s23, 0
      %p198 = por %p196, %p197
      %p199 = scmp.ne.s32.totalorder %s188, %s191
      %p200 = scmp.eq.s32.totalorder %s28, 11
      %p201 = por %p199, %p200
      %p202 = scmp.ne.s32.totalorder %s191, %s192
      %p203 = scmp.eq.s32.totalorder %s28, 0
      %p204 = por %p202, %p203
      %p205 = scmp.ne.s32.totalorder %s191, %s192
      %p206 = scmp.eq.s32.totalorder %s29, 11
      %p207 = por %p205, %p206
      %p209 = scmp.ne.s32.totalorder %s192, %s208
      %p210 = scmp.eq.s32.totalorder %s29, 0
      %p211 = por %p209, %p210
      %p212 = scmp.le.s32.totalorder 1, %s23
      %p213 = scmp.lt.s32.totalorder %s23, 13
      %p214 = pnand %p212, %p213
      %p215 = pneg %p214
      // Predicated region
      $region9: #{model_forward.2} parent=5 // pred_check
        _
      $region10: #{model_forward.2} parent=5 // pred_check_branch
        %217 = sbr.rel (%p214) target = $region12
      $region11: #{model_forward.2} parent=5 // pred_region
        %s218 = ssub.s32 %s23, 1
        // Predicated region
        $region13: #{model_forward.2} parent=11 // pred_check
          %p219 = pneg %p136
        $region14: #{model_forward.2} parent=11 // pred_check_branch
          %221 = sbr.rel (%p219) target = $region16
        $region15: #{model_forward.2} parent=11 // pred_region
          %s223 = ssub.s32 1024, 1024
          %224 = vsyncadd [#allocation11], %s223
          %s225 = sshll.u32 [#allocation10], 4
          %s226 = int_to_ptr.vmem [resolvable:$true] %s225
          %231 = dma.hbm_to_vmem [thread:$0]  %s3, 1024, %s226, [#allocation11], 64, 64, 4
        $region16: #{model_forward.2} parent=11 // pred_fallthru
          _
        // Predicated region
        $region17: #{model_forward.2} parent=11 // pred_check
          %p232 = pneg %p157
        $region18: #{model_forward.2} parent=11 // pred_check_branch
          %234 = sbr.rel (%p232) target = $region20
        $region19: #{model_forward.2} parent=11 // pred_region
          %s236 = ssub.s32 1024, 1024
          %237 = vsyncadd [#allocation11], %s236
          %s238 = sshll.u32 [#allocation12], 4
          %s239 = int_to_ptr.vmem [resolvable:$true] %s238
          %244 = dma.hbm_to_vmem [thread:$0]  %s4, 1024, %s239, [#allocation11], 64, 64, 4
        $region20: #{model_forward.2} parent=11 // pred_fallthru
          _
        // Predicated region
        $region21: #{model_forward.2} parent=11 // pred_check
          %p245 = pneg %p178
        $region22: #{model_forward.2} parent=11 // pred_check_branch
          %247 = sbr.rel (%p245) target = $region24
        $region23: #{model_forward.2} parent=11 // pred_region
          %s249 = ssub.s32 16, 16
          %250 = vsyncadd [#allocation14], %s249
          %s252 = sshll.u32 [#allocation13], 4
          %s253 = int_to_ptr.vmem [resolvable:$true] %s252
          %255 = dma.hbm_to_vmem [thread:$0]  %s5, 16, %s253, [#allocation14]
        $region24: #{model_forward.2} parent=11 // pred_fallthru
          _
      $region12: #{model_forward.2} parent=5 // pred_fallthru
        _
      %p256 = scmp.lt.s32.totalorder %s23, 12
      // Predicated region
      $region25: #{model_forward.2} parent=5 // pred_check
        %p257 = pneg %p256
      $region26: #{model_forward.2} parent=5 // pred_check_branch
        %259 = sbr.rel (%p257) target = $region28
      $region27: #{model_forward.2} parent=5 // pred_region
        // Predicated region
        $region29: #{model_forward.2} parent=27 // pred_check
          %p260 = pneg %p57
        $region30: #{model_forward.2} parent=27 // pred_check_branch
          %262 = sbr.rel (%p260) target = $region32
        $region31: #{model_forward.2} parent=27 // pred_region
          %s263 = sand.u32 %s47, 1
          %s264 = scalar_lea.sflag [#allocation5], %s263
          %s265 = sand.u32 %s47, 1
          %s266 = smul.addr %s265, 32
          %s267 = scalar_lea.vmem [#allocation4], %s266
          %s268 = smul.u32 8, %s30
          %s270 = ssub.s32 512, 512
          %271 = vsyncadd %s264, %s270
          %s272 = smul.addr %s268, 3
          %s273 = sadd.s32 %s31, %s272
          %s274 = smul.addr %s273, 64
          %s275 = scalar_lea.hbm %s0, %s274
          %s276 = sshll.u32 %s267, 4
          %s277 = int_to_ptr.vmem [resolvable:$true] %s276
          %282 = dma.hbm_to_vmem [thread:$0]  %s275, 512, %s277, %s264, 192, 64, 4
        $region32: #{model_forward.2} parent=27 // pred_fallthru
          _
        // Predicated region
        $region33: #{model_forward.2} parent=27 // pred_check
          %p283 = pneg %p83
        $region34: #{model_forward.2} parent=27 // pred_check_branch
          %285 = sbr.rel (%p283) target = $region36
        $region35: #{model_forward.2} parent=27 // pred_region
          %s286 = sand.u32 %s23, 1
          %s287 = scalar_lea.sflag [#allocation8], %s286
          %s288 = sand.u32 %s73, 1
          %s289 = smul.addr %s288, 64
          %s290 = scalar_lea.vmem [#allocation7], %s289
          %s291 = smul.u32 16, %s31
          %s293 = ssub.s32 1024, 1024
          %294 = vsyncadd %s287, %s293
          %s295 = smul.addr %s291, 64
          %s296 = scalar_lea.hbm %s1, %s295
          %s297 = sshll.u32 %s290, 4
          %s298 = int_to_ptr.vmem [resolvable:$true] %s297
          %303 = dma.hbm_to_vmem [thread:$0]  %s296, 1024, %s298, %s287, 64, 64, 4
        $region36: #{model_forward.2} parent=27 // pred_fallthru
          _
        // Predicated region
        $region37: #{model_forward.2} parent=27 // pred_check
          %p304 = pneg %p109
        $region38: #{model_forward.2} parent=27 // pred_check_branch
          %306 = sbr.rel (%p304) target = $region40
        $region39: #{model_forward.2} parent=27 // pred_region
          %s307 = sand.u32 %s23, 1
          %s308 = scalar_lea.sflag [#allocation8], %s307
          %s309 = sand.u32 %s99, 1
          %s310 = smul.addr %s309, 32
          %s311 = scalar_lea.vmem [#allocation9], %s310
          %s312 = smul.u32 8, %s30
          %s314 = ssub.s32 512, 512
          %315 = vsyncadd %s308, %s314
          %s316 = smul.addr %s312, 64
          %s317 = scalar_lea.hbm %s2, %s316
          %s318 = sshll.u32 %s311, 4
          %s319 = int_to_ptr.vmem [resolvable:$true] %s318
          %324 = dma.hbm_to_vmem [thread:$0]  %s317, 512, %s319, %s308, 64, 64, 4
        $region40: #{model_forward.2} parent=27 // pred_fallthru
          _
      $region28: #{model_forward.2} parent=5 // pred_fallthru
        _
      %p325 = scmp.le.s32.totalorder 1, %s23
      %p326 = scmp.lt.s32.totalorder %s23, 13
      %p327 = pnand %p325, %p326
      %p328 = pneg %p327
      // Predicated region
      $region41: #{model_forward.2} parent=5 // pred_check
        _
      $region42: #{model_forward.2} parent=5 // pred_check_branch
        %330 = sbr.rel (%p327) target = $region44
      $region43: #{model_forward.2} parent=5 // pred_region
        %s331 = ssub.s32 %s23, 1
        %s332 = sand.u32 %s50, 1
        %s333 = scalar_lea.sflag [#allocation5], %s332
        %s334 = sand.u32 %s50, 1
        %s335 = smul.addr %s334, 32
        %s336 = scalar_lea.vmem [#allocation4], %s335
        // Predicated region
        $region45: #{model_forward.2} parent=43 // pred_check
          %p337 = pneg %p63
        $region46: #{model_forward.2} parent=43 // pred_check_branch
          %339 = sbr.rel (%p337) target = $region48
        $region47: #{model_forward.2} parent=43 // pred_region
          %340 = dma.done %s333, 512
        $region48: #{model_forward.2} parent=43 // pred_fallthru
          _
        %s341 = sand.u32 %s28, 1
        %s342 = scalar_lea.sflag [#allocation8], %s341
        %s343 = sand.u32 %s76, 1
        %s344 = smul.addr %s343, 64
        %s345 = scalar_lea.vmem [#allocation7], %s344
        // Predicated region
        $region49: #{model_forward.2} parent=43 // pred_check
          %p346 = pneg %p89
        $region50: #{model_forward.2} parent=43 // pred_check_branch
          %348 = sbr.rel (%p346) target = $region52
        $region51: #{model_forward.2} parent=43 // pred_region
          %349 = dma.done %s342, 1024
        $region52: #{model_forward.2} parent=43 // pred_fallthru
          _
        %s350 = sand.u32 %s28, 1
        %s351 = scalar_lea.sflag [#allocation8], %s350
        %s352 = sand.u32 %s102, 1
        %s353 = smul.addr %s352, 32
        %s354 = scalar_lea.vmem [#allocation9], %s353
        // Predicated region
        $region53: #{model_forward.2} parent=43 // pred_check
          %p355 = pneg %p115
        $region54: #{model_forward.2} parent=43 // pred_check_branch
          %357 = sbr.rel (%p355) target = $region56
        $region55: #{model_forward.2} parent=43 // pred_region
          %358 = dma.done %s351, 512
        $region56: #{model_forward.2} parent=43 // pred_fallthru
          _
        // Predicated region
        $region57: #{model_forward.2} parent=43 // pred_check
          %p359 = pneg %p136
        $region58: #{model_forward.2} parent=43 // pred_check_branch
          %361 = sbr.rel (%p359) target = $region60
        $region59: #{model_forward.2} parent=43 // pred_region
          %362 = dma.done [#allocation11], 1024
        $region60: #{model_forward.2} parent=43 // pred_fallthru
          _
        // Predicated region
        $region61: #{model_forward.2} parent=43 // pred_check
          %p363 = pneg %p157
        $region62: #{model_forward.2} parent=43 // pred_check_branch
          %365 = sbr.rel (%p363) target = $region64
        $region63: #{model_forward.2} parent=43 // pred_region
          %366 = dma.done [#allocation11], 1024
        $region64: #{model_forward.2} parent=43 // pred_fallthru
          _
        // Predicated region
        $region65: #{model_forward.2} parent=43 // pred_check
          %p367 = pneg %p178
        $region66: #{model_forward.2} parent=43 // pred_check_branch
          %369 = sbr.rel (%p367) target = $region68
        $region67: #{model_forward.2} parent=43 // pred_region
          %370 = dma.done [#allocation14], 16
        $region68: #{model_forward.2} parent=43 // pred_fallthru
          _
        %s371 = sand.u32 %s50, 1
        %s372 = scalar_lea.sflag [#allocation5], %s371
        %s373 = sand.u32 %s50, 1
        %s374 = smul.addr %s373, 32
        %s375 = scalar_lea.vmem [#allocation4], %s374
        %p376 = pneg %p63
        %p377 = pneg %p60
        %s378 = sand.u32 %s28, 1
        %s379 = scalar_lea.sflag [#allocation8], %s378
        %s380 = sand.u32 %s76, 1
        %s381 = smul.addr %s380, 64
        %s382 = scalar_lea.vmem [#allocation7], %s381
        %p383 = pneg %p89
        %p384 = pneg %p86
        %s385 = sand.u32 %s28, 1
        %s386 = scalar_lea.sflag [#allocation8], %s385
        %s387 = sand.u32 %s102, 1
        %s388 = smul.addr %s387, 32
        %s389 = scalar_lea.vmem [#allocation9], %s388
        %p390 = pneg %p115
        %p391 = pneg %p112
        %p392 = pneg %p136
        %p393 = pneg %p133
        %p394 = pneg %p157
        %p395 = pneg %p154
        %p396 = pneg %p178
        %p397 = pneg %p175
        %p398 = pneg %p204
        %p399 = pneg %p201
        %s400 = sand.u32 %s191, 1
        %s401 = scalar_lea.sflag [#allocation6], %s400
        %s402 = sand.u32 %s191, 1
        %s403 = smul.addr %s402, 32
        %s404 = scalar_lea.vmem [#allocation15], %s403
        %s405 = smul.u32 8, %s32
        %s406 = smul.u32 16, %s33
        %s407 = smul.u32 8, %s32
        %s408 = smul.u32 8, %s32
        %p410 = scmp.eq.s32.totalorder %s33, 0
        // Predicated region
        $region69: #{model_forward.2} parent=43 // pred_check
          %p411 = pneg %p410
        $region70: #{model_forward.2} parent=43 // pred_check_branch
          %413 = sbr.rel (%p411) target = $region72
        $region71: #{model_forward.2} parent=43 // pred_region
          %414 = vst [vmem:[#allocation2] sm:$0xff] 0.0
          %415 = vst [vmem:[#allocation2 + $0x8] sm:$0xff] 0.0
          %416 = vst [vmem:[#allocation2 + $0x10] sm:$0xff] 0.0
          %417 = vst [vmem:[#allocation2 + $0x18] sm:$0xff] 0.0
          %418 = vst [vmem:[#allocation2 + $0x20] sm:$0xff] 0.0
          %419 = vst [vmem:[#allocation2 + $0x28] sm:$0xff] 0.0
          %420 = vst [vmem:[#allocation2 + $0x30] sm:$0xff] 0.0
          %421 = vst [vmem:[#allocation2 + $0x38] sm:$0xff] 0.0
          %v422 = vld [vmem:[%s354] sm:$0xf]
          %v423 = vld [vmem:[%s354 + $0x4] sm:$0xf]
          %v424 = vld [vmem:[%s354 + $0x8] sm:$0xf]
          %v425 = vld [vmem:[%s354 + $0xc] sm:$0xf]
          %v426 = vld [vmem:[%s354 + $0x10] sm:$0xf]
          %v427 = vld [vmem:[%s354 + $0x14] sm:$0xf]
          %v428 = vld [vmem:[%s354 + $0x18] sm:$0xf]
          %v429 = vld [vmem:[%s354 + $0x1c] sm:$0xf]
          %v430 = vld [vmem:[#allocation10] sm:$0xf]
          %v431 = vld [vmem:[#allocation10 + $0x4] sm:$0xf]
          %v432 = vld [vmem:[#allocation10 + $0x8] sm:$0xf]
          %v433 = vld [vmem:[#allocation10 + $0xc] sm:$0xf]
          %v434 = vld [vmem:[#allocation10 + $0x10] sm:$0xf]
          %v435 = vld [vmem:[#allocation10 + $0x14] sm:$0xf]
          %v436 = vld [vmem:[#allocation10 + $0x18] sm:$0xf]
          %v437 = vld [vmem:[#allocation10 + $0x1c] sm:$0xf]
          %v438 = vld [vmem:[#allocation10 + $0x20] sm:$0xf]
          %v439 = vld [vmem:[#allocation10 + $0x24] sm:$0xf]
          %v440 = vld [vmem:[#allocation10 + $0x28] sm:$0xf]
          %v441 = vld [vmem:[#allocation10 + $0x2c] sm:$0xf]
          %v442 = vld [vmem:[#allocation10 + $0x30] sm:$0xf]
          %v443 = vld [vmem:[#allocation10 + $0x34] sm:$0xf]
          %v444 = vld [vmem:[#allocation10 + $0x38] sm:$0xf]
          %v445 = vld [vmem:[#allocation10 + $0x3c] sm:$0xf]
          %v446 = vld [vmem:[#allocation13] sm:$0x1]
          %v448 = vlaneseq
          %v449 = vshrl.u32 %v448, 7
          %v450 = vsub.s32 0, %v449
          %v451 = vrot.slane %v446, %v450
          %v461 = vunpack.c.l.b16 %v422
          %v462 = vunpack.c.l.b16 %v423
          %v463 = vunpack.c.l.b16 %v424
          %v464 = vunpack.c.l.b16 %v425
          %v465 = vunpack.c.l.b16 %v426
          %v466 = vunpack.c.l.b16 %v427
          %v467 = vunpack.c.l.b16 %v428
          %v468 = vunpack.c.l.b16 %v429
          %v469 = vpack.c.b16 %v462, %v461
          %v470 = vpack.c.b16 %v464, %v463
          %v471 = vpack.c.b16 %v466, %v465
          %v472 = vpack.c.b16 %v468, %v467
          %v493 = vunpack.c.l.b16 %v430
          %v494 = vunpack.c.l.b16 %v431
          %v495 = vunpack.c.l.b16 %v432
          %v496 = vunpack.c.l.b16 %v433
          %v497 = vunpack.c.l.b16 %v434
          %v498 = vunpack.c.l.b16 %v435
          %v499 = vunpack.c.l.b16 %v436
          %v500 = vunpack.c.l.b16 %v437
          %v501 = vunpack.c.l.b16 %v438
          %v502 = vunpack.c.l.b16 %v439
          %v503 = vunpack.c.l.b16 %v440
          %v504 = vunpack.c.l.b16 %v441
          %v505 = vunpack.c.l.b16 %v442
          %v506 = vunpack.c.l.b16 %v443
          %v507 = vunpack.c.l.b16 %v444
          %v508 = vunpack.c.l.b16 %v445
          %v509 = vpack.c.b16 %v494, %v493
          %v510 = vpack.c.b16 %v496, %v495
          %v511 = vpack.c.b16 %v498, %v497
          %v512 = vpack.c.b16 %v500, %v499
          %v513 = vpack.c.b16 %v502, %v501
          %v514 = vpack.c.b16 %v504, %v503
          %v515 = vpack.c.b16 %v506, %v505
          %v516 = vpack.c.b16 %v508, %v507
          %525 = vmatprep.subr.bf16.mxu0 0
          %526 = vmatpush1.bf16.msra.mxu0 %v509
          %527 = vmatprep.subr.bf16.mxu0 0
          %528 = vmatpush1.bf16.msra.mxu0 %v510
          %529 = vmatprep.subr.bf16.mxu0 0
          %530 = vmatpush1.bf16.msra.mxu0 %v511
          %531 = vmatprep.subr.bf16.mxu0 0
          %532 = vmatpush1.bf16.msra.mxu0 %v512
          %533 = vmatprep.subr.bf16.mxu0 0
          %534 = vmatpush1.bf16.msra.mxu0 %v513
          %535 = vmatprep.subr.bf16.mxu0 0
          %536 = vmatpush1.bf16.msra.mxu0 %v514
          %537 = vmatprep.subr.bf16.mxu0 0
          %538 = vmatpush1.bf16.msra.mxu0 %v515
          %539 = vmatprep.subr.bf16.mxu0 0
          %540 = vmatpush1.bf16.msra.mxu0 %v516
          %541 = vmatprep.subr.bf16.mxu0 0
          %542 = vmatpush1.bf16.msra.mxu0 0
          %543 = vmatprep.subr.bf16.mxu0 0
          %544 = vmatpush1.bf16.msra.mxu0 0
          %545 = vmatprep.subr.bf16.mxu0 0
          %546 = vmatpush1.bf16.msra.mxu0 0
          %547 = vmatprep.subr.bf16.mxu0 0
          %548 = vmatpush1.bf16.msra.mxu0 0
          %549 = vmatprep.subr.bf16.mxu0 0
          %550 = vmatpush1.bf16.msra.mxu0 0
          %551 = vmatprep.subr.bf16.mxu0 0
          %552 = vmatpush1.bf16.msra.mxu0 0
          %553 = vmatprep.subr.bf16.mxu0 0
          %554 = vmatpush1.bf16.msra.mxu0 0
          %555 = vmatprep.subr.bf16.mxu0 0
          %556 = vmatpush1.bf16.msra.mxu0 0
          %557 = vmatprep.mubr.bf16.mxu0 0
          %558 = vmatmul.mubr.bf16.gmra.mrb[0].mxu0 %v469
          %v559 = vpop.f32.mrb[0].mxu0
          %v560 = vadd.f32 %v451, %v559
          %v561 = vpop.f32.mrb[0].mxu0
          %v562 = vpop.f32.mrb[0].mxu0
          %v563 = vadd.f32 %v451, %v562
          %v564 = vpop.f32.mrb[0].mxu0
          %565 = vmatprep.mubr.bf16.mxu0 0
          %566 = vmatmul.mubr.bf16.gmra.mrb[0].mxu0 %v470
          %v567 = vpop.f32.mrb[0].mxu0
          %v568 = vadd.f32 %v451, %v567
          %v569 = vpop.f32.mrb[0].mxu0
          %v570 = vpop.f32.mrb[0].mxu0
          %v571 = vadd.f32 %v451, %v570
          %v572 = vpop.f32.mrb[0].mxu0
          %573 = vmatprep.mubr.bf16.mxu0 0
          %574 = vmatmul.mubr.bf16.gmra.mrb[0].mxu0 %v471
          %v575 = vpop.f32.mrb[0].mxu0
          %v576 = vadd.f32 %v451, %v575
          %v577 = vpop.f32.mrb[0].mxu0
          %v578 = vpop.f32.mrb[0].mxu0
          %v579 = vadd.f32 %v451, %v578
          %v580 = vpop.f32.mrb[0].mxu0
          %581 = vmatprep.mubr.bf16.mxu0 0
          %582 = vmatmul.mubr.bf16.gmra.mrb[0].mxu0 %v472
          %v583 = vpop.f32.mrb[0].mxu0
          %v584 = vadd.f32 %v451, %v583
          %v585 = vpop.f32.mrb[0].mxu0
          %v586 = vpop.f32.mrb[0].mxu0
          %v587 = vadd.f32 %v451, %v586
          %v588 = vpop.f32.mrb[0].mxu0
          %589 = vdwg.mxu0
          %590 = vst [vmem:[#allocation3] sm:$0xff] %v560
          %591 = vst [vmem:[#allocation3 + $0x8] sm:$0xff] %v563
          %592 = vst [vmem:[#allocation3 + $0x10] sm:$0xff] %v568
          %593 = vst [vmem:[#allocation3 + $0x18] sm:$0xff] %v571
          %594 = vst [vmem:[#allocation3 + $0x20] sm:$0xff] %v576
          %595 = vst [vmem:[#allocation3 + $0x28] sm:$0xff] %v579
          %596 = vst [vmem:[#allocation3 + $0x30] sm:$0xff] %v584
          %597 = vst [vmem:[#allocation3 + $0x38] sm:$0xff] %v587
        $region72: #{model_forward.2} parent=43 // pred_fallthru
          _
        %v598 = vld [vmem:[#allocation2] sm:$0xff]
        %v599 = vld [vmem:[#allocation2 + $0x8] sm:$0xff]
        %v600 = vld [vmem:[#allocation2 + $0x10] sm:$0xff]
        %v601 = vld [vmem:[#allocation2 + $0x18] sm:$0xff]
        %v602 = vld [vmem:[#allocation2 + $0x20] sm:$0xff]
        %v603 = vld [vmem:[#allocation2 + $0x28] sm:$0xff]
        %v604 = vld [vmem:[#allocation2 + $0x30] sm:$0xff]
        %v605 = vld [vmem:[#allocation2 + $0x38] sm:$0xff]
        %v606 = vld [vmem:[%s336] sm:$0xf]
        %v607 = vld [vmem:[%s336 + $0x4] sm:$0xf]
        %v608 = vld [vmem:[%s336 + $0x8] sm:$0xf]
        %v609 = vld [vmem:[%s336 + $0xc] sm:$0xf]
        %v610 = vld [vmem:[%s336 + $0x10] sm:$0xf]
        %v611 = vld [vmem:[%s336 + $0x14] sm:$0xf]
        %v612 = vld [vmem:[%s336 + $0x18] sm:$0xf]
        %v613 = vld [vmem:[%s336 + $0x1c] sm:$0xf]
        %v614 = vld [vmem:[%s345] sm:$0xf]
        %v615 = vld [vmem:[%s345 + $0x4] sm:$0xf]
        %v616 = vld [vmem:[%s345 + $0x8] sm:$0xf]
        %v617 = vld [vmem:[%s345 + $0xc] sm:$0xf]
        %v618 = vld [vmem:[%s345 + $0x10] sm:$0xf]
        %v619 = vld [vmem:[%s345 + $0x14] sm:$0xf]
        %v620 = vld [vmem:[%s345 + $0x18] sm:$0xf]
        %v621 = vld [vmem:[%s345 + $0x1c] sm:$0xf]
        %v622 = vld [vmem:[%s345 + $0x20] sm:$0xf]
        %v623 = vld [vmem:[%s345 + $0x24] sm:$0xf]
        %v624 = vld [vmem:[%s345 + $0x28] sm:$0xf]
        %v625 = vld [vmem:[%s345 + $0x2c] sm:$0xf]
        %v626 = vld [vmem:[%s345 + $0x30] sm:$0xf]
        %v627 = vld [vmem:[%s345 + $0x34] sm:$0xf]
        %v628 = vld [vmem:[%s345 + $0x38] sm:$0xf]
        %v629 = vld [vmem:[%s345 + $0x3c] sm:$0xf]
        %v638 = vunpack.c.l.b16 %v606
        %v639 = vunpack.c.l.b16 %v607
        %v640 = vunpack.c.l.b16 %v608
        %v641 = vunpack.c.l.b16 %v609
        %v642 = vunpack.c.l.b16 %v610
        %v643 = vunpack.c.l.b16 %v611
        %v644 = vunpack.c.l.b16 %v612
        %v645 = vunpack.c.l.b16 %v613
        %v646 = vpack.c.b16 %v639, %v638
        %v647 = vpack.c.b16 %v641, %v640
        %v648 = vpack.c.b16 %v643, %v642
        %v649 = vpack.c.b16 %v645, %v644
        %v670 = vunpack.c.l.b16 %v614
        %v671 = vunpack.c.l.b16 %v615
        %v672 = vunpack.c.l.b16 %v616
        %v673 = vunpack.c.l.b16 %v617
        %v674 = vunpack.c.l.b16 %v618
        %v675 = vunpack.c.l.b16 %v619
        %v676 = vunpack.c.l.b16 %v620
        %v677 = vunpack.c.l.b16 %v621
        %v678 = vunpack.c.l.b16 %v622
        %v679 = vunpack.c.l.b16 %v623
        %v680 = vunpack.c.l.b16 %v624
        %v681 = vunpack.c.l.b16 %v625
        %v682 = vunpack.c.l.b16 %v626
        %v683 = vunpack.c.l.b16 %v627
        %v684 = vunpack.c.l.b16 %v628
        %v685 = vunpack.c.l.b16 %v629
        %v686 = vpack.c.b16 %v671, %v670
        %v687 = vpack.c.b16 %v673, %v672
        %v688 = vpack.c.b16 %v675, %v674
        %v689 = vpack.c.b16 %v677, %v676
        %v690 = vpack.c.b16 %v679, %v678
        %v691 = vpack.c.b16 %v681, %v680
        %v692 = vpack.c.b16 %v683, %v682
        %v693 = vpack.c.b16 %v685, %v684
        %702 = vmatprep.subr.bf16.mxu0 0
        %703 = vmatpush1.bf16.msra.mxu0 %v686
        %704 = vmatprep.subr.bf16.mxu0 0
        %705 = vmatpush1.bf16.msra.mxu0 %v687
        %706 = vmatprep.subr.bf16.mxu0 0
        %707 = vmatpush1.bf16.msra.mxu0 %v688
        %708 = vmatprep.subr.bf16.mxu0 0
        %709 = vmatpush1.bf16.msra.mxu0 %v689
        %710 = vmatprep.subr.bf16.mxu0 0
        %711 = vmatpush1.bf16.msra.mxu0 %v690
        %712 = vmatprep.subr.bf16.mxu0 0
        %713 = vmatpush1.bf16.msra.mxu0 %v691
        %714 = vmatprep.subr.bf16.mxu0 0
        %715 = vmatpush1.bf16.msra.mxu0 %v692
        %716 = vmatprep.subr.bf16.mxu0 0
        %717 = vmatpush1.bf16.msra.mxu0 %v693
        %718 = vmatprep.subr.bf16.mxu0 0
        %719 = vmatpush1.bf16.msra.mxu0 0
        %720 = vmatprep.subr.bf16.mxu0 0
        %721 = vmatpush1.bf16.msra.mxu0 0
        %722 = vmatprep.subr.bf16.mxu0 0
        %723 = vmatpush1.bf16.msra.mxu0 0
        %724 = vmatprep.subr.bf16.mxu0 0
        %725 = vmatpush1.bf16.msra.mxu0 0
        %726 = vmatprep.subr.bf16.mxu0 0
        %727 = vmatpush1.bf16.msra.mxu0 0
        %728 = vmatprep.subr.bf16.mxu0 0
        %729 = vmatpush1.bf16.msra.mxu0 0
        %730 = vmatprep.subr.bf16.mxu0 0
        %731 = vmatpush1.bf16.msra.mxu0 0
        %732 = vmatprep.subr.bf16.mxu0 0
        %733 = vmatpush1.bf16.msra.mxu0 0
        %734 = vmatprep.mubr.bf16.mxu0 0
        %735 = vmatmul.mubr.bf16.gmra.mrb[0].mxu0 %v646
        %v736 = vpop.f32.mrb[0].mxu0
        %v737 = vadd.f32 0.0, %v736
        %v738 = vpop.f32.mrb[0].mxu0
        %v739 = vpop.f32.mrb[0].mxu0
        %v740 = vadd.f32 0.0, %v739
        %v741 = vpop.f32.mrb[0].mxu0
        %742 = vmatprep.mubr.bf16.mxu0 0
        %743 = vmatmul.mubr.bf16.gmra.mrb[0].mxu0 %v647
        %v744 = vpop.f32.mrb[0].mxu0
        %v745 = vadd.f32 0.0, %v744
        %v746 = vpop.f32.mrb[0].mxu0
        %v747 = vpop.f32.mrb[0].mxu0
        %v748 = vadd.f32 0.0, %v747
        %v749 = vpop.f32.mrb[0].mxu0
        %750 = vmatprep.mubr.bf16.mxu0 0
        %751 = vmatmul.mubr.bf16.gmra.mrb[0].mxu0 %v648
        %v752 = vpop.f32.mrb[0].mxu0
        %v753 = vadd.f32 0.0, %v752
        %v754 = vpop.f32.mrb[0].mxu0
        %v755 = vpop.f32.mrb[0].mxu0
        %v756 = vadd.f32 0.0, %v755
        %v757 = vpop.f32.mrb[0].mxu0
        %758 = vmatprep.mubr.bf16.mxu0 0
        %759 = vmatmul.mubr.bf16.gmra.mrb[0].mxu0 %v649
        %v760 = vpop.f32.mrb[0].mxu0
        %v761 = vadd.f32 0.0, %v760
        %v762 = vpop.f32.mrb[0].mxu0
        %v763 = vpop.f32.mrb[0].mxu0
        %v764 = vadd.f32 0.0, %v763
        %v765 = vpop.f32.mrb[0].mxu0
        %766 = vdwg.mxu0
        %v767 = vadd.f32 %v598, %v737
        %v768 = vadd.f32 %v599, %v740
        %v769 = vadd.f32 %v600, %v745
        %v770 = vadd.f32 %v601, %v748
        %v771 = vadd.f32 %v602, %v753
        %v772 = vadd.f32 %v603, %v756
        %v773 = vadd.f32 %v604, %v761
        %v774 = vadd.f32 %v605, %v764
        %775 = vst [vmem:[#allocation2] sm:$0xff] %v767
        %776 = vst [vmem:[#allocation2 + $0x8] sm:$0xff] %v768
        %777 = vst [vmem:[#allocation2 + $0x10] sm:$0xff] %v769
        %778 = vst [vmem:[#allocation2 + $0x18] sm:$0xff] %v770
        %779 = vst [vmem:[#allocation2 + $0x20] sm:$0xff] %v771
        %780 = vst [vmem:[#allocation2 + $0x28] sm:$0xff] %v772
        %781 = vst [vmem:[#allocation2 + $0x30] sm:$0xff] %v773
        %782 = vst [vmem:[#allocation2 + $0x38] sm:$0xff] %v774
        %p783 = scmp.eq.s32.totalorder %s33, 2
        // Predicated region
        $region73: #{model_forward.2} parent=43 // pred_check
          %p784 = pneg %p783
        $region74: #{model_forward.2} parent=43 // pred_check_branch
          %786 = sbr.rel (%p784) target = $region76
        $region75: #{model_forward.2} parent=43 // pred_region
          %v787 = vld [vmem:[#allocation3] sm:$0xff]
          %v788 = vld [vmem:[#allocation3 + $0x8] sm:$0xff]
          %v789 = vld [vmem:[#allocation3 + $0x10] sm:$0xff]
          %v790 = vld [vmem:[#allocation3 + $0x18] sm:$0xff]
          %v791 = vld [vmem:[#allocation3 + $0x20] sm:$0xff]
          %v792 = vld [vmem:[#allocation3 + $0x28] sm:$0xff]
          %v793 = vld [vmem:[#allocation3 + $0x30] sm:$0xff]
          %v794 = vld [vmem:[#allocation3 + $0x38] sm:$0xff]
          %v795 = vld [vmem:[#allocation2] sm:$0xff]
          %v796 = vld [vmem:[#allocation2 + $0x8] sm:$0xff]
          %v797 = vld [vmem:[#allocation2 + $0x10] sm:$0xff]
          %v798 = vld [vmem:[#allocation2 + $0x18] sm:$0xff]
          %v799 = vld [vmem:[#allocation2 + $0x20] sm:$0xff]
          %v800 = vld [vmem:[#allocation2 + $0x28] sm:$0xff]
          %v801 = vld [vmem:[#allocation2 + $0x30] sm:$0xff]
          %v802 = vld [vmem:[#allocation2 + $0x38] sm:$0xff]
          %v803 = vpack.c.bf16 %v796, %v795
          %v804 = vpack.c.bf16 %v798, %v797
          %v805 = vpack.c.bf16 %v800, %v799
          %v806 = vpack.c.bf16 %v802, %v801
          %v807 = vld [vmem:[#allocation12] sm:$0xf]
          %v808 = vld [vmem:[#allocation12 + $0x4] sm:$0xf]
          %v809 = vld [vmem:[#allocation12 + $0x8] sm:$0xf]
          %v810 = vld [vmem:[#allocation12 + $0xc] sm:$0xf]
          %v811 = vld [vmem:[#allocation12 + $0x10] sm:$0xf]
          %v812 = vld [vmem:[#allocation12 + $0x14] sm:$0xf]
          %v813 = vld [vmem:[#allocation12 + $0x18] sm:$0xf]
          %v814 = vld [vmem:[#allocation12 + $0x1c] sm:$0xf]
          %v815 = vld [vmem:[#allocation12 + $0x20] sm:$0xf]
          %v816 = vld [vmem:[#allocation12 + $0x24] sm:$0xf]
          %v817 = vld [vmem:[#allocation12 + $0x28] sm:$0xf]
          %v818 = vld [vmem:[#allocation12 + $0x2c] sm:$0xf]
          %v819 = vld [vmem:[#allocation12 + $0x30] sm:$0xf]
          %v820 = vld [vmem:[#allocation12 + $0x34] sm:$0xf]
          %v821 = vld [vmem:[#allocation12 + $0x38] sm:$0xf]
          %v822 = vld [vmem:[#allocation12 + $0x3c] sm:$0xf]
          %v839 = vunpack.c.l.b16 %v807
          %v840 = vunpack.c.l.b16 %v808
          %v841 = vunpack.c.l.b16 %v809
          %v842 = vunpack.c.l.b16 %v810
          %v843 = vunpack.c.l.b16 %v811
          %v844 = vunpack.c.l.b16 %v812
          %v845 = vunpack.c.l.b16 %v813
          %v846 = vunpack.c.l.b16 %v814
          %v847 = vunpack.c.l.b16 %v815
          %v848 = vunpack.c.l.b16 %v816
          %v849 = vunpack.c.l.b16 %v817
          %v850 = vunpack.c.l.b16 %v818
          %v851 = vunpack.c.l.b16 %v819
          %v852 = vunpack.c.l.b16 %v820
          %v853 = vunpack.c.l.b16 %v821
          %v854 = vunpack.c.l.b16 %v822
          %v855 = vpack.c.b16 %v840, %v839
          %v856 = vpack.c.b16 %v842, %v841
          %v857 = vpack.c.b16 %v844, %v843
          %v858 = vpack.c.b16 %v846, %v845
          %v859 = vpack.c.b16 %v848, %v847
          %v860 = vpack.c.b16 %v850, %v849
          %v861 = vpack.c.b16 %v852, %v851
          %v862 = vpack.c.b16 %v854, %v853
          %871 = vmatprep.subr.bf16.mxu0 0
          %872 = vmatpush1.bf16.msra.mxu0 %v855
          %873 = vmatprep.subr.bf16.mxu0 0
          %874 = vmatpush1.bf16.msra.mxu0 %v856
          %875 = vmatprep.subr.bf16.mxu0 0
          %876 = vmatpush1.bf16.msra.mxu0 %v857
          %877 = vmatprep.subr.bf16.mxu0 0
          %878 = vmatpush1.bf16.msra.mxu0 %v858
          %879 = vmatprep.subr.bf16.mxu0 0
          %880 = vmatpush1.bf16.msra.mxu0 %v859
          %881 = vmatprep.subr.bf16.mxu0 0
          %882 = vmatpush1.bf16.msra.mxu0 %v860
          %883 = vmatprep.subr.bf16.mxu0 0
          %884 = vmatpush1.bf16.msra.mxu0 %v861
          %885 = vmatprep.subr.bf16.mxu0 0
          %886 = vmatpush1.bf16.msra.mxu0 %v862
          %887 = vmatprep.subr.bf16.mxu0 0
          %888 = vmatpush1.bf16.msra.mxu0 0
          %889 = vmatprep.subr.bf16.mxu0 0
          %890 = vmatpush1.bf16.msra.mxu0 0
          %891 = vmatprep.subr.bf16.mxu0 0
          %892 = vmatpush1.bf16.msra.mxu0 0
          %893 = vmatprep.subr.bf16.mxu0 0
          %894 = vmatpush1.bf16.msra.mxu0 0
          %895 = vmatprep.subr.bf16.mxu0 0
          %896 = vmatpush1.bf16.msra.mxu0 0
          %897 = vmatprep.subr.bf16.mxu0 0
          %898 = vmatpush1.bf16.msra.mxu0 0
          %899 = vmatprep.subr.bf16.mxu0 0
          %900 = vmatpush1.bf16.msra.mxu0 0
          %901 = vmatprep.subr.bf16.mxu0 0
          %902 = vmatpush1.bf16.msra.mxu0 0
          %903 = vmatprep.mubr.bf16.mxu0 0
          %904 = vmatmul.mubr.bf16.gmra.mrb[0].mxu0 %v803
          %v905 = vpop.f32.mrb[0].mxu0
          %v906 = vadd.f32 0.0, %v905
          %v907 = vpop.f32.mrb[0].mxu0
          %v908 = vpop.f32.mrb[0].mxu0
          %v909 = vadd.f32 0.0, %v908
          %v910 = vpop.f32.mrb[0].mxu0
          %911 = vmatprep.mubr.bf16.mxu0 0
          %912 = vmatmul.mubr.bf16.gmra.mrb[0].mxu0 %v804
          %v913 = vpop.f32.mrb[0].mxu0
          %v914 = vadd.f32 0.0, %v913
          %v915 = vpop.f32.mrb[0].mxu0
          %v916 = vpop.f32.mrb[0].mxu0
          %v917 = vadd.f32 0.0, %v916
          %v918 = vpop.f32.mrb[0].mxu0
          %919 = vmatprep.mubr.bf16.mxu0 0
          %920 = vmatmul.mubr.bf16.gmra.mrb[0].mxu0 %v805
          %v921 = vpop.f32.mrb[0].mxu0
          %v922 = vadd.f32 0.0, %v921
          %v923 = vpop.f32.mrb[0].mxu0
          %v924 = vpop.f32.mrb[0].mxu0
          %v925 = vadd.f32 0.0, %v924
          %v926 = vpop.f32.mrb[0].mxu0
          %927 = vmatprep.mubr.bf16.mxu0 0
          %928 = vmatmul.mubr.bf16.gmra.mrb[0].mxu0 %v806
          %v929 = vpop.f32.mrb[0].mxu0
          %v930 = vadd.f32 0.0, %v929
          %v931 = vpop.f32.mrb[0].mxu0
          %v932 = vpop.f32.mrb[0].mxu0
          %v933 = vadd.f32 0.0, %v932
          %v934 = vpop.f32.mrb[0].mxu0
          %935 = vdwg.mxu0
          %v936 = vadd.f32 %v787, %v906
          %v937 = vadd.f32 %v788, %v909
          %v938 = vadd.f32 %v789, %v914
          %v939 = vadd.f32 %v790, %v917
          %v940 = vadd.f32 %v791, %v922
          %v941 = vadd.f32 %v792, %v925
          %v942 = vadd.f32 %v793, %v930
          %v943 = vadd.f32 %v794, %v933
          %v944 = vmax.f32 %v936, 0.0
          %v945 = vmax.f32 %v937, 0.0
          %v946 = vmax.f32 %v938, 0.0
          %v947 = vmax.f32 %v939, 0.0
          %v948 = vmax.f32 %v940, 0.0
          %v949 = vmax.f32 %v941, 0.0
          %v950 = vmax.f32 %v942, 0.0
          %v951 = vmax.f32 %v943, 0.0
          %v952 = vpack.c.bf16 %v945, %v944
          %v953 = vpack.c.bf16 %v947, %v946
          %v954 = vpack.c.bf16 %v949, %v948
          %v955 = vpack.c.bf16 %v951, %v950
          %v960 = vunpack.c.l.b16 %v952
          %v961 = vunpack.c.h.b16 %v952
          %v962 = vunpack.c.l.b16 %v953
          %v963 = vunpack.c.h.b16 %v953
          %v964 = vunpack.c.l.b16 %v954
          %v965 = vunpack.c.h.b16 %v954
          %v966 = vunpack.c.l.b16 %v955
          %v967 = vunpack.c.h.b16 %v955
          %v968 = vpack.c.b16 %v960, %v960
          %v969 = vpack.c.b16 %v961, %v961
          %v970 = vpack.c.b16 %v962, %v962
          %v971 = vpack.c.b16 %v963, %v963
          %v972 = vpack.c.b16 %v964, %v964
          %v973 = vpack.c.b16 %v965, %v965
          %v974 = vpack.c.b16 %v966, %v966
          %v975 = vpack.c.b16 %v967, %v967
          %984 = vst [vmem:[%s404] sm:$0xf] %v968
          %985 = vst [vmem:[%s404 + $0x4] sm:$0xf] %v969
          %986 = vst [vmem:[%s404 + $0x8] sm:$0xf] %v970
          %987 = vst [vmem:[%s404 + $0xc] sm:$0xf] %v971
          %988 = vst [vmem:[%s404 + $0x10] sm:$0xf] %v972
          %989 = vst [vmem:[%s404 + $0x14] sm:$0xf] %v973
          %990 = vst [vmem:[%s404 + $0x18] sm:$0xf] %v974
          %991 = vst [vmem:[%s404 + $0x1c] sm:$0xf] %v975
        $region76: #{model_forward.2} parent=43 // pred_fallthru
          _
        %s992 = sand.u32 %s191, 1
        %s993 = scalar_lea.sflag [#allocation6], %s992
        %s994 = sand.u32 %s191, 1
        %s995 = smul.addr %s994, 32
        %s996 = scalar_lea.vmem [#allocation15], %s995
        // Predicated region
        $region77: #{model_forward.2} parent=43 // pred_check
          %p997 = pneg %p201
        $region78: #{model_forward.2} parent=43 // pred_check_branch
          %999 = sbr.rel (%p997) target = $region80
        $region79: #{model_forward.2} parent=43 // pred_region
          %s1000 = smul.u32 8, %s32
          %s1002 = ssub.s32 512, 512
          %1003 = vsyncadd %s993, %s1002
          %s1004 = smul.addr %s1000, 64
          %s1005 = scalar_lea.hbm %s6, %s1004
          %s1006 = sshll.u32 %s996, 4
          %s1007 = int_to_ptr.vmem [resolvable:$true] %s1006
          %1012 = dma.vmem_to_hbm [thread:$0]  %s1007, 512, %s1005, %s993, 64, 64, 4
        $region80: #{model_forward.2} parent=43 // pred_fallthru
          _
      $region44: #{model_forward.2} parent=5 // pred_fallthru
        _
      %p1013 = scmp.le.s32.totalorder 2, %s23
      // Predicated region
      $region81: #{model_forward.2} parent=5 // pred_check
        %p1014 = pneg %p1013
      $region82: #{model_forward.2} parent=5 // pred_check_branch
        %1016 = sbr.rel (%p1014) target = $region84
      $region83: #{model_forward.2} parent=5 // pred_region
        %s1017 = ssub.s32 %s23, 2
        // Predicated region
        $region85: #{model_forward.2} parent=83 // pred_check
          %p1018 = pneg %p207
        $region86: #{model_forward.2} parent=83 // pred_check_branch
          %1020 = sbr.rel (%p1018) target = $region88
        $region87: #{model_forward.2} parent=83 // pred_region
          %s1021 = sand.u32 %s192, 1
          %s1022 = scalar_lea.sflag [#allocation6], %s1021
          %s1023 = sand.u32 %s192, 1
          %s1024 = smul.addr %s1023, 32
          %s1025 = scalar_lea.vmem [#allocation15], %s1024
          %1026 = dma.done %s1022, 512
        $region88: #{model_forward.2} parent=83 // pred_fallthru
          _
      $region84: #{model_forward.2} parent=5 // pred_fallthru
        _
    $region6: #{model_forward.2} parent=1 // loop_footer
      %s27 = sadd.s32 1, %s23
    $region7: #{model_forward.2} parent=1 // loop_footer_branch
      %22 = sbr.rel target = $region3
    $region8: #{model_forward.2} parent=1 // loop_exit
      _
    %1027 = vsyncpa [#allocation5], 1
    %s1028 = scalar_lea.sflag [#allocation5], 1
    %1029 = vsyncpa %s1028, 1
    %1030 = vsyncpa [#allocation8], 1
    %s1031 = scalar_lea.sflag [#allocation8], 1
    %1032 = vsyncpa %s1031, 1
    %1033 = vsyncpa [#allocation11], 1
    %1034 = vsyncpa [#allocation14], 1
    %1035 = vsyncpa [#allocation6], 1
    %s1036 = scalar_lea.sflag [#allocation6], 1
    %1037 = vsyncpa %s1036, 1

</llo_original>
